<compile_context>
chip_gen: v7x
topology: tpu7x:2x2x1
jax: 0.10.0
libtpu: 0.0.40
codegen_flags: <defaults>
</compile_context>

<pallas_src>
import functools
import math

import jax
import jax.numpy as jnp
from jax import lax
from jax.experimental import pallas as pl
from jax.experimental.pallas import tpu as pltpu


# ----------------------------------------------------------------------------
# Fused kernel: RoPE + masked softmax attention (all heads) + Wo projection
# ----------------------------------------------------------------------------
def _fused_rope_attn_wo_kernel(qkv_ref, cos_ref, sin_ref, bias_ref, wo_ref,
                               wob_ref, o_ref, *, num_heads, head_dim, q_tile):
    """One (batch, q-row-tile) grid step.

    Blocks:
      qkv  (1, S, 3*dim)   bf16  packed [q | k | v], head-major within each
      cos  (S, Dh//2)      f32   rotary cos table (head-invariant)
      sin  (S, Dh//2)      f32
      bias (1, 1, S)       f32   additive key-mask bias (0 / -1e30)
      wo   (dim, dim)      bf16  Wo^T  (y = x @ wo)
      wob  (1, dim)        f32   Wo bias
      out  (1, Tq, dim)    f32
    """
    dim = num_heads * head_dim
    half = head_dim // 2
    S = qkv_ref.shape[1]
    tq = q_tile

    qkv_all = qkv_ref[0]                                    # (S, 3*dim) bf16
    cos_all = cos_ref[...]                                   # (S, Dh//2) f32
    sin_all = sin_ref[...]

    if tq == S:                                              # single q tile
        qkv_q = qkv_all
        cos_q, sin_q = cos_all, sin_all
    else:
        q_start = pl.multiple_of(pl.program_id(1) * tq, tq)
        qkv_q = qkv_ref[0, pl.ds(q_start, tq), :]            # (Tq, 3*dim)
        cos_q = cos_ref[pl.ds(q_start, tq), :]
        sin_q = sin_ref[pl.ds(q_start, tq), :]

    # RoPE / softmax math stays f32 (portable to v5e); MXU operands are bf16.
    q_flat = qkv_q[:, :dim].astype(jnp.float32)              # (Tq, dim)
    k_flat = qkv_all[:, dim:2 * dim].astype(jnp.float32)     # (S, dim)
    v_flat = qkv_all[:, 2 * dim:]                            # (S, dim) bf16

    # Key-mask bias broadcast ONCE (hoisted out of the head loop).
    bias = jnp.broadcast_to(bias_ref[0], (tq, S))            # (Tq, S) f32

    scale = 1.0 / math.sqrt(head_dim)

    def rope(x, c, s):
        # Non-interleaved rotate-half on one head: x (rows, Dh), c/s (rows, Dh//2).
        x1 = x[:, :half]
        x2 = x[:, half:]
        return jnp.concatenate([x1 * c - x2 * s, x2 * c + x1 * s], axis=-1)

    # Static loop over heads (num_heads is a compile-time constant); each
    # head's (Tq, S) scores/probs feed only that head's PV and are dead before
    # the next head starts.
    # TODO(synk): for num_heads >= ~12 with large S, bound vreg live ranges
    # with a fori_loop / extra grid axis over heads.
    head_outs = []
    for h in range(num_heads):
        lo = h * head_dim
        qh = (rope(q_flat[:, lo:lo + head_dim], cos_q, sin_q) * scale
              ).astype(jnp.bfloat16)                          # (Tq, Dh)
        kh = rope(k_flat[:, lo:lo + head_dim], cos_all, sin_all
                  ).astype(jnp.bfloat16)                      # (S, Dh)
        vh = v_flat[:, lo:lo + head_dim]                      # (S, Dh) bf16

        scores = lax.dot_general(qh, kh, (((1,), (1,)), ((), ())),
                                 preferred_element_type=jnp.float32)  # (Tq, S)
        scores = scores + bias                                # f32 mask add
        m = jnp.max(scores, axis=-1, keepdims=True)
        # Un-normalized probabilities; normalization is applied AFTER the PV
        # matmul on the (Tq, Dh) result (S/Dh-fold fewer VPU multiplies).
        # TODO(synk): on v6e/v7x a bf16 exp would relieve the EUP further.
        p = jnp.exp(scores - m)
        denom = jnp.sum(p, axis=-1, keepdims=True)            # (Tq, 1)
        pv = jnp.dot(p.astype(jnp.bfloat16), vh,
                     preferred_element_type=jnp.float32)      # (Tq, Dh)
        head_outs.append(pv * pl.reciprocal(denom, approx=False))

    attn = jnp.concatenate(head_outs, axis=-1)                # (Tq, dim) f32

    # Fused output projection: one lane-dense (Tq,dim)@(dim,dim) MXU matmul and
    # a single full-width store.
    y = jnp.dot(attn.astype(jnp.bfloat16), wo_ref[...],
                preferred_element_type=jnp.float32)
    o_ref[0, :, :] = (y + wob_ref[...]).astype(o_ref.dtype)


# ----------------------------------------------------------------------------
# pallas_call wrapper
# ----------------------------------------------------------------------------
def fused_rope_attention_wo(qkv_pad, cos_tab, sin_tab, mask_bias, wo_t, wo_b,
                            num_heads, head_dim, q_tile):
    B, S, three_dim = qkv_pad.shape
    dim = num_heads * head_dim
    n_q = S // q_tile
    kernel = functools.partial(_fused_rope_attn_wo_kernel, num_heads=num_heads,
                               head_dim=head_dim, q_tile=q_tile)

    def run(invariant_mode):
        kw = {} if invariant_mode is None else {"pipeline_mode": invariant_mode}
        return pl.pallas_call(
            kernel,
            out_shape=jax.ShapeDtypeStruct((B, S, dim), jnp.float32),
            grid=(B, n_q),
            in_specs=[
                pl.BlockSpec((1, S, three_dim), lambda b, q: (b, 0, 0)),
                pl.BlockSpec(cos_tab.shape, lambda b, q: (0, 0), **kw),
                pl.BlockSpec(sin_tab.shape, lambda b, q: (0, 0), **kw),
                pl.BlockSpec((1, 1, S), lambda b, q: (b, 0, 0)),
                pl.BlockSpec((dim, dim), lambda b, q: (0, 0), **kw),
                pl.BlockSpec((1, dim), lambda b, q: (0, 0), **kw),
            ],
            out_specs=pl.BlockSpec((1, q_tile, dim), lambda b, q: (b, q, 0)),
            compiler_params=pltpu.CompilerParams(
                dimension_semantics=("parallel", "parallel"),
                vmem_limit_bytes=48 * 1024 * 1024),
        )(qkv_pad, cos_tab, sin_tab, mask_bias, wo_t, wo_b)

    try:
        # Grid-invariant operands (rope tables, Wo, Wo bias): single-buffered.
        return run(pl.Buffered(1))
    except Exception:
        # TODO(synk): pipeline_mode / pl.Buffered not supported by this Pallas
        # build; fall back to default double-buffering of invariant operands.
        return run(None)


def flexbert_unpad_rope_parallel_attention(
    qkv, cu_seqlens, max_seqlen, indices, attn_mask,
    wo_weight, wo_bias, num_heads, rotary_base=10000.0,
):
    """Full forward pass of FlexBertUnpadRopeParallelAttention (SDPA path).

    NOTE: rotary positions are recovered from the right-padded layout implied
    by `indices` / `attn_mask` (padded position == in-sequence position), which
    matches the cu_seqlens-based rotary of the PyTorch module for the standard
    unpad_input ordering.
    """
    del cu_seqlens, max_seqlen
    nnz, three_dim = qkv.shape
    dim = three_dim // 3
    head_dim = dim // num_heads
    B, S = attn_mask.shape

    # pad_input scatter, kept in bf16 (halves the dominant HBM traffic and the
    # qkv block VMEM); the kernel casts to f32 where elementwise f32 is needed.
    qkv_pad = (
        jnp.zeros((B * S, three_dim), jnp.bfloat16)
        .at[indices].set(qkv.astype(jnp.bfloat16))
        .reshape(B, S, three_dim)
    )

    # Compact head-invariant rotary tables: (S, head_dim // 2).
    inv_freq = 1.0 / (rotary_base ** (
        jnp.arange(0, head_dim, 2, dtype=jnp.float32) / head_dim))
    pos = jnp.arange(S, dtype=jnp.float32)
    freqs = pos[:, None] * inv_freq[None, :]                  # (S, Dh//2)
    cos_tab = jnp.cos(freqs)
    sin_tab = jnp.sin(freqs)

    # Additive key-mask bias, precomputed once. Keep -1e30 and the mask add in
    # f32 (bf16 would overflow to -inf and NaN the max-subtraction).
    mask_bias = jnp.where(attn_mask > 0, 0.0, -1e30).astype(jnp.float32)
    mask_bias = mask_bias.reshape(B, 1, S)

    # q-row tile: whole sequence for short S, 128/256-row "parallel" tiles
    # otherwise (bounds the (Tq, S) score live-set, feeds both v7x TCs).
    q_tile = S
    for cand in (256, 128):
        if S > cand and S % cand == 0:
            q_tile = cand
            break
    # TODO(synk): for S >= ~1024 add a kv grid axis with online softmax so the
    # (Tq, S) scores never materialize (needed to fit v7x's 64 MiB VMEM at
    # very long sequences).

    wo_t = wo_weight.T.astype(jnp.bfloat16)                   # (dim, dim)
    wo_b = wo_bias.astype(jnp.float32).reshape(1, dim)

    out = fused_rope_attention_wo(qkv_pad, cos_tab, sin_tab, mask_bias,
                                  wo_t, wo_b, num_heads, head_dim, q_tile)

    # unpad_input_only; Wo(unpad(x)) == unpad(Wo(x)), so the gather stays after
    # the fused kernel. out_drop is identity (p=0).
    # TODO(synk): attention / output dropout paths (p > 0) not implemented.
    return out.reshape(B * S, dim)[indices]


# ----------------------------------------------------------------------------
# Pure-JAX f32 reference (for correctness check)
# ----------------------------------------------------------------------------
def _reference(qkv, indices, attn_mask, wo_weight, wo_bias, num_heads, base=10000.0):
    nnz, three_dim = qkv.shape
    dim = three_dim // 3
    hd = dim // num_heads
    B, S = attn_mask.shape
    qkv_pad = (
        jnp.zeros((B * S, three_dim), qkv.dtype).at[indices].set(qkv)
        .reshape(B, S, 3, num_heads, hd)
    )
    inv_freq = 1.0 / (base ** (jnp.arange(0, hd, 2, dtype=jnp.float32) / hd))
    pos = jnp.arange(S, dtype=jnp.float32)
    cos = jnp.cos(pos[:, None] * inv_freq[None, :])
    sin = jnp.sin(pos[:, None] * inv_freq[None, :])

    def rope(x):  # (B, S, H, hd)
        x1, x2 = x[..., : hd // 2], x[..., hd // 2:]
        c = cos[None, :, None, :]
        s = sin[None, :, None, :]
        return jnp.concatenate([x1 * c - x2 * s, x2 * c + x1 * s], axis=-1)

    q = jnp.transpose(rope(qkv_pad[:, :, 0]), (0, 2, 1, 3))
    k = jnp.transpose(rope(qkv_pad[:, :, 1]), (0, 2, 1, 3))
    v = jnp.transpose(qkv_pad[:, :, 2], (0, 2, 1, 3))

    scores = jnp.einsum("bhqd,bhkd->bhqk", q, k) / math.sqrt(hd)
    bias = jnp.where(attn_mask[:, None, None, :] > 0, 0.0, -1e30)
    p = jax.nn.softmax(scores + bias, axis=-1)
    o = jnp.einsum("bhqk,bhkd->bhqd", p, v)
    o = jnp.transpose(o, (0, 2, 1, 3)).reshape(B * S, dim)[indices]
    return o @ wo_weight.T + wo_bias


# ----------------------------------------------------------------------------
# Main
# ----------------------------------------------------------------------------
if __name__ == "__main__":
    # Small config: hidden=128, heads=4, head_dim=32, batch=2, max_seqlen=8
    B, S = 2, 8
    num_heads = 4
    head_dim = 32
    dim = num_heads * head_dim

    seqlens = [8, 5]
    nnz = sum(seqlens)
    cu_seqlens = jnp.array([0, 8, 13], dtype=jnp.int32)
    attn_mask = jnp.array(
        [[1] * seqlens[0] + [0] * (S - seqlens[0]),
         [1] * seqlens[1] + [0] * (S - seqlens[1])],
        dtype=jnp.int32,
    )
    indices = jnp.array(
        [b * S + s for b in range(B) for s in range(seqlens[b])],
        dtype=jnp.int32,
    )

    key = jax.random.PRNGKey(0)
    k1, k2, k3 = jax.random.split(key, 3)
    qkv = jax.random.normal(k1, (nnz, 3 * dim), dtype=jnp.float32)
    wo_weight = jax.random.normal(k2, (dim, dim), dtype=jnp.float32) * 0.02  # (out, in)
    wo_bias = jax.random.normal(k3, (dim,), dtype=jnp.float32) * 0.02

    out = flexbert_unpad_rope_parallel_attention(
        qkv, cu_seqlens, S, indices, attn_mask, wo_weight, wo_bias, num_heads
    )
    out = jax.block_until_ready(out)

    ref = _reference(qkv, indices, attn_mask, wo_weight, wo_bias, num_heads)
    assert out.shape == (nnz, dim), out.shape
    # bf16 padded-qkv I/O + bf16 MXU operands (f32 accumulation) vs a pure-f32
    # reference => relaxed tolerance; real bugs produce O(1) errors.
    err = float(jnp.max(jnp.abs(out - ref)))
    assert jnp.allclose(out, ref, atol=4e-2, rtol=4e-2), err
    print("KERNEL_OK")
</pallas_src>

<mosaic_0001>
module attributes {stable_mosaic.version = 11 : i64} {
  func.func @_fused_rope_attn_wo_kernel(%arg0: i32, %arg1: i32, %arg2: memref<1x8x384xbf16, #tpu.memory_space<vmem>>, %arg3: memref<8x16xf32, #tpu.memory_space<vmem>>, %arg4: memref<8x16xf32, #tpu.memory_space<vmem>>, %arg5: memref<1x1x8xf32, #tpu.memory_space<vmem>>, %arg6: memref<128x128xbf16, #tpu.memory_space<vmem>>, %arg7: memref<1x128xf32, #tpu.memory_space<vmem>>, %arg8: memref<1x8x128xf32, #tpu.memory_space<vmem>>) attributes {dimension_semantics = [#tpu.dimension_semantics<parallel>, #tpu.dimension_semantics<parallel>], iteration_bounds = array<i64: 2, 1>, scalar_prefetch = 0 : i64, scratch_operands = 0 : i64, tpu.core_type = #tpu.core_type<tc>, window_params = [{transform_indices = @transform_0, window_bounds = array<i64: 1, 8, 384>}, {pipeline_mode = #tpu.pipeline_mode<synchronous>, transform_indices = @transform_1, window_bounds = array<i64: 8, 16>}, {pipeline_mode = #tpu.pipeline_mode<synchronous>, transform_indices = @transform_2, window_bounds = array<i64: 8, 16>}, {transform_indices = @transform_3, window_bounds = array<i64: 1, 1, 8>}, {pipeline_mode = #tpu.pipeline_mode<synchronous>, transform_indices = @transform_4, window_bounds = array<i64: 128, 128>}, {pipeline_mode = #tpu.pipeline_mode<synchronous>, transform_indices = @transform_5, window_bounds = array<i64: 1, 128>}, {transform_indices = @transform_6, window_bounds = array<i64: 1, 8, 128>}]} {
    %c0 = arith.constant 0 : index
    %c0_0 = arith.constant 0 : index
    %c0_1 = arith.constant 0 : index
    %0 = vector.load %arg2[%c0, %c0_0, %c0_1] : memref<1x8x384xbf16, #tpu.memory_space<vmem>>, vector<1x8x384xbf16>
    %1 = vector.shape_cast %0 : vector<1x8x384xbf16> to vector<8x384xbf16>
    %c0_2 = arith.constant 0 : index
    %c0_3 = arith.constant 0 : index
    %2 = vector.load %arg3[%c0_2, %c0_3] : memref<8x16xf32, #tpu.memory_space<vmem>>, vector<8x16xf32>
    %c0_4 = arith.constant 0 : index
    %c0_5 = arith.constant 0 : index
    %3 = vector.load %arg4[%c0_4, %c0_5] : memref<8x16xf32, #tpu.memory_space<vmem>>, vector<8x16xf32>
    %4 = vector.extract_strided_slice %1 {offsets = [0, 0], sizes = [8, 128], strides = [1, 1]} : vector<8x384xbf16> to vector<8x128xbf16>
    %5 = arith.extf %4 : vector<8x128xbf16> to vector<8x128xf32>
    %6 = vector.extract_strided_slice %1 {offsets = [0, 128], sizes = [8, 128], strides = [1, 1]} : vector<8x384xbf16> to vector<8x128xbf16>
    %7 = arith.extf %6 : vector<8x128xbf16> to vector<8x128xf32>
    %8 = vector.extract_strided_slice %1 {offsets = [0, 256], sizes = [8, 128], strides = [1, 1]} : vector<8x384xbf16> to vector<8x128xbf16>
    %c0_6 = arith.constant 0 : index
    %c0_7 = arith.constant 0 : index
    %c0_8 = arith.constant 0 : index
    %9 = vector.load %arg5[%c0_6, %c0_7, %c0_8] : memref<1x1x8xf32, #tpu.memory_space<vmem>>, vector<1x1x8xf32>
    %10 = vector.shape_cast %9 : vector<1x1x8xf32> to vector<1x8xf32>
    %11 = vector.shape_cast %10 : vector<1x8xf32> to vector<1x8xf32>
    %12 = vector.broadcast %11 : vector<1x8xf32> to vector<8x8xf32>
    %13 = vector.extract_strided_slice %5 {offsets = [0, 0], sizes = [8, 32], strides = [1, 1]} : vector<8x128xf32> to vector<8x32xf32>
    %14 = vector.extract_strided_slice %13 {offsets = [0, 0], sizes = [8, 16], strides = [1, 1]} : vector<8x32xf32> to vector<8x16xf32>
    %15 = vector.extract_strided_slice %13 {offsets = [0, 16], sizes = [8, 16], strides = [1, 1]} : vector<8x32xf32> to vector<8x16xf32>
    %16 = arith.mulf %14, %2 : vector<8x16xf32>
    %17 = arith.mulf %15, %3 : vector<8x16xf32>
    %18 = arith.subf %16, %17 : vector<8x16xf32>
    %19 = arith.mulf %15, %2 : vector<8x16xf32>
    %20 = arith.mulf %14, %3 : vector<8x16xf32>
    %21 = arith.addf %19, %20 : vector<8x16xf32>
    %22 = tpu.concatenate %18, %21 in 1 : vector<8x16xf32>, vector<8x16xf32> -> vector<8x32xf32>
    %cst = arith.constant 0.176776692 : f32
    %23 = vector.broadcast %cst : f32 to vector<8x32xf32>
    %24 = arith.mulf %22, %23 : vector<8x32xf32>
    %25 = arith.truncf %24 : vector<8x32xf32> to vector<8x32xbf16>
    %26 = vector.extract_strided_slice %7 {offsets = [0, 0], sizes = [8, 32], strides = [1, 1]} : vector<8x128xf32> to vector<8x32xf32>
    %27 = vector.extract_strided_slice %26 {offsets = [0, 0], sizes = [8, 16], strides = [1, 1]} : vector<8x32xf32> to vector<8x16xf32>
    %28 = vector.extract_strided_slice %26 {offsets = [0, 16], sizes = [8, 16], strides = [1, 1]} : vector<8x32xf32> to vector<8x16xf32>
    %29 = arith.mulf %27, %2 : vector<8x16xf32>
    %30 = arith.mulf %28, %3 : vector<8x16xf32>
    %31 = arith.subf %29, %30 : vector<8x16xf32>
    %32 = arith.mulf %28, %2 : vector<8x16xf32>
    %33 = arith.mulf %27, %3 : vector<8x16xf32>
    %34 = arith.addf %32, %33 : vector<8x16xf32>
    %35 = tpu.concatenate %31, %34 in 1 : vector<8x16xf32>, vector<8x16xf32> -> vector<8x32xf32>
    %36 = arith.truncf %35 : vector<8x32xf32> to vector<8x32xbf16>
    %37 = vector.extract_strided_slice %8 {offsets = [0, 0], sizes = [8, 32], strides = [1, 1]} : vector<8x128xbf16> to vector<8x32xbf16>
    %cst_9 = arith.constant dense<0.000000e+00> : vector<8x8xf32>
    %38 = tpu.matmul %25, %36, %cst_9 {dimension_numbers = #tpu.dot_dimension_numbers<[1], [1], [0], [0], [0, 0, 1, 0], [], []>} : vector<8x32xbf16>, vector<8x32xbf16>, vector<8x8xf32> -> vector<8x8xf32>
    %39 = arith.addf %38, %12 : vector<8x8xf32>
    %cst_10 = arith.constant dense<0xFF800000> : vector<8xf32>
    %40 = vector.multi_reduction <maximumf>, %39, %cst_10 [1] : vector<8x8xf32> to vector<8xf32>
    %41 = vector.shape_cast %40 : vector<8xf32> to vector<8x1xf32>
    %42 = vector.broadcast %41 : vector<8x1xf32> to vector<8x8xf32>
    %43 = arith.subf %39, %42 : vector<8x8xf32>
    %44 = math.exp %43 : vector<8x8xf32>
    %cst_11 = arith.constant dense<0.000000e+00> : vector<8xf32>
    %45 = vector.multi_reduction <add>, %44, %cst_11 [1] : vector<8x8xf32> to vector<8xf32>
    %46 = vector.shape_cast %45 : vector<8xf32> to vector<8x1xf32>
    %47 = arith.truncf %44 : vector<8x8xf32> to vector<8x8xbf16>
    %cst_12 = arith.constant dense<0.000000e+00> : vector<8x32xf32>
    %48 = tpu.matmul %47, %37, %cst_12 {dimension_numbers = #tpu.dot_dimension_numbers<[1], [0], [0], [1], [0, 0, 1, 1], [], []>} : vector<8x8xbf16>, vector<8x32xbf16>, vector<8x32xf32> -> vector<8x32xf32>
    %49 = tpu.reciprocal %46 : vector<8x1xf32> -> vector<8x1xf32>
    %50 = vector.broadcast %49 : vector<8x1xf32> to vector<8x32xf32>
    %51 = arith.mulf %48, %50 : vector<8x32xf32>
    %52 = vector.extract_strided_slice %5 {offsets = [0, 32], sizes = [8, 32], strides = [1, 1]} : vector<8x128xf32> to vector<8x32xf32>
    %53 = vector.extract_strided_slice %52 {offsets = [0, 0], sizes = [8, 16], strides = [1, 1]} : vector<8x32xf32> to vector<8x16xf32>
    %54 = vector.extract_strided_slice %52 {offsets = [0, 16], sizes = [8, 16], strides = [1, 1]} : vector<8x32xf32> to vector<8x16xf32>
    %55 = arith.mulf %53, %2 : vector<8x16xf32>
    %56 = arith.mulf %54, %3 : vector<8x16xf32>
    %57 = arith.subf %55, %56 : vector<8x16xf32>
    %58 = arith.mulf %54, %2 : vector<8x16xf32>
    %59 = arith.mulf %53, %3 : vector<8x16xf32>
    %60 = arith.addf %58, %59 : vector<8x16xf32>
    %61 = tpu.concatenate %57, %60 in 1 : vector<8x16xf32>, vector<8x16xf32> -> vector<8x32xf32>
    %cst_13 = arith.constant 0.176776692 : f32
    %62 = vector.broadcast %cst_13 : f32 to vector<8x32xf32>
    %63 = arith.mulf %61, %62 : vector<8x32xf32>
    %64 = arith.truncf %63 : vector<8x32xf32> to vector<8x32xbf16>
    %65 = vector.extract_strided_slice %7 {offsets = [0, 32], sizes = [8, 32], strides = [1, 1]} : vector<8x128xf32> to vector<8x32xf32>
    %66 = vector.extract_strided_slice %65 {offsets = [0, 0], sizes = [8, 16], strides = [1, 1]} : vector<8x32xf32> to vector<8x16xf32>
    %67 = vector.extract_strided_slice %65 {offsets = [0, 16], sizes = [8, 16], strides = [1, 1]} : vector<8x32xf32> to vector<8x16xf32>
    %68 = arith.mulf %66, %2 : vector<8x16xf32>
    %69 = arith.mulf %67, %3 : vector<8x16xf32>
    %70 = arith.subf %68, %69 : vector<8x16xf32>
    %71 = arith.mulf %67, %2 : vector<8x16xf32>
    %72 = arith.mulf %66, %3 : vector<8x16xf32>
    %73 = arith.addf %71, %72 : vector<8x16xf32>
    %74 = tpu.concatenate %70, %73 in 1 : vector<8x16xf32>, vector<8x16xf32> -> vector<8x32xf32>
    %75 = arith.truncf %74 : vector<8x32xf32> to vector<8x32xbf16>
    %76 = vector.extract_strided_slice %8 {offsets = [0, 32], sizes = [8, 32], strides = [1, 1]} : vector<8x128xbf16> to vector<8x32xbf16>
    %cst_14 = arith.constant dense<0.000000e+00> : vector<8x8xf32>
    %77 = tpu.matmul %64, %75, %cst_14 {dimension_numbers = #tpu.dot_dimension_numbers<[1], [1], [0], [0], [0, 0, 1, 0], [], []>} : vector<8x32xbf16>, vector<8x32xbf16>, vector<8x8xf32> -> vector<8x8xf32>
    %78 = arith.addf %77, %12 : vector<8x8xf32>
    %cst_15 = arith.constant dense<0xFF800000> : vector<8xf32>
    %79 = vector.multi_reduction <maximumf>, %78, %cst_15 [1] : vector<8x8xf32> to vector<8xf32>
    %80 = vector.shape_cast %79 : vector<8xf32> to vector<8x1xf32>
    %81 = vector.broadcast %80 : vector<8x1xf32> to vector<8x8xf32>
    %82 = arith.subf %78, %81 : vector<8x8xf32>
    %83 = math.exp %82 : vector<8x8xf32>
    %cst_16 = arith.constant dense<0.000000e+00> : vector<8xf32>
    %84 = vector.multi_reduction <add>, %83, %cst_16 [1] : vector<8x8xf32> to vector<8xf32>
    %85 = vector.shape_cast %84 : vector<8xf32> to vector<8x1xf32>
    %86 = arith.truncf %83 : vector<8x8xf32> to vector<8x8xbf16>
    %cst_17 = arith.constant dense<0.000000e+00> : vector<8x32xf32>
    %87 = tpu.matmul %86, %76, %cst_17 {dimension_numbers = #tpu.dot_dimension_numbers<[1], [0], [0], [1], [0, 0, 1, 1], [], []>} : vector<8x8xbf16>, vector<8x32xbf16>, vector<8x32xf32> -> vector<8x32xf32>
    %88 = tpu.reciprocal %85 : vector<8x1xf32> -> vector<8x1xf32>
    %89 = vector.broadcast %88 : vector<8x1xf32> to vector<8x32xf32>
    %90 = arith.mulf %87, %89 : vector<8x32xf32>
    %91 = vector.extract_strided_slice %5 {offsets = [0, 64], sizes = [8, 32], strides = [1, 1]} : vector<8x128xf32> to vector<8x32xf32>
    %92 = vector.extract_strided_slice %91 {offsets = [0, 0], sizes = [8, 16], strides = [1, 1]} : vector<8x32xf32> to vector<8x16xf32>
    %93 = vector.extract_strided_slice %91 {offsets = [0, 16], sizes = [8, 16], strides = [1, 1]} : vector<8x32xf32> to vector<8x16xf32>
    %94 = arith.mulf %92, %2 : vector<8x16xf32>
    %95 = arith.mulf %93, %3 : vector<8x16xf32>
    %96 = arith.subf %94, %95 : vector<8x16xf32>
    %97 = arith.mulf %93, %2 : vector<8x16xf32>
    %98 = arith.mulf %92, %3 : vector<8x16xf32>
    %99 = arith.addf %97, %98 : vector<8x16xf32>
    %100 = tpu.concatenate %96, %99 in 1 : vector<8x16xf32>, vector<8x16xf32> -> vector<8x32xf32>
    %cst_18 = arith.constant 0.176776692 : f32
    %101 = vector.broadcast %cst_18 : f32 to vector<8x32xf32>
    %102 = arith.mulf %100, %101 : vector<8x32xf32>
    %103 = arith.truncf %102 : vector<8x32xf32> to vector<8x32xbf16>
    %104 = vector.extract_strided_slice %7 {offsets = [0, 64], sizes = [8, 32], strides = [1, 1]} : vector<8x128xf32> to vector<8x32xf32>
    %105 = vector.extract_strided_slice %104 {offsets = [0, 0], sizes = [8, 16], strides = [1, 1]} : vector<8x32xf32> to vector<8x16xf32>
    %106 = vector.extract_strided_slice %104 {offsets = [0, 16], sizes = [8, 16], strides = [1, 1]} : vector<8x32xf32> to vector<8x16xf32>
    %107 = arith.mulf %105, %2 : vector<8x16xf32>
    %108 = arith.mulf %106, %3 : vector<8x16xf32>
    %109 = arith.subf %107, %108 : vector<8x16xf32>
    %110 = arith.mulf %106, %2 : vector<8x16xf32>
    %111 = arith.mulf %105, %3 : vector<8x16xf32>
    %112 = arith.addf %110, %111 : vector<8x16xf32>
    %113 = tpu.concatenate %109, %112 in 1 : vector<8x16xf32>, vector<8x16xf32> -> vector<8x32xf32>
    %114 = arith.truncf %113 : vector<8x32xf32> to vector<8x32xbf16>
    %115 = vector.extract_strided_slice %8 {offsets = [0, 64], sizes = [8, 32], strides = [1, 1]} : vector<8x128xbf16> to vector<8x32xbf16>
    %cst_19 = arith.constant dense<0.000000e+00> : vector<8x8xf32>
    %116 = tpu.matmul %103, %114, %cst_19 {dimension_numbers = #tpu.dot_dimension_numbers<[1], [1], [0], [0], [0, 0, 1, 0], [], []>} : vector<8x32xbf16>, vector<8x32xbf16>, vector<8x8xf32> -> vector<8x8xf32>
    %117 = arith.addf %116, %12 : vector<8x8xf32>
    %cst_20 = arith.constant dense<0xFF800000> : vector<8xf32>
    %118 = vector.multi_reduction <maximumf>, %117, %cst_20 [1] : vector<8x8xf32> to vector<8xf32>
    %119 = vector.shape_cast %118 : vector<8xf32> to vector<8x1xf32>
    %120 = vector.broadcast %119 : vector<8x1xf32> to vector<8x8xf32>
    %121 = arith.subf %117, %120 : vector<8x8xf32>
    %122 = math.exp %121 : vector<8x8xf32>
    %cst_21 = arith.constant dense<0.000000e+00> : vector<8xf32>
    %123 = vector.multi_reduction <add>, %122, %cst_21 [1] : vector<8x8xf32> to vector<8xf32>
    %124 = vector.shape_cast %123 : vector<8xf32> to vector<8x1xf32>
    %125 = arith.truncf %122 : vector<8x8xf32> to vector<8x8xbf16>
    %cst_22 = arith.constant dense<0.000000e+00> : vector<8x32xf32>
    %126 = tpu.matmul %125, %115, %cst_22 {dimension_numbers = #tpu.dot_dimension_numbers<[1], [0], [0], [1], [0, 0, 1, 1], [], []>} : vector<8x8xbf16>, vector<8x32xbf16>, vector<8x32xf32> -> vector<8x32xf32>
    %127 = tpu.reciprocal %124 : vector<8x1xf32> -> vector<8x1xf32>
    %128 = vector.broadcast %127 : vector<8x1xf32> to vector<8x32xf32>
    %129 = arith.mulf %126, %128 : vector<8x32xf32>
    %130 = vector.extract_strided_slice %5 {offsets = [0, 96], sizes = [8, 32], strides = [1, 1]} : vector<8x128xf32> to vector<8x32xf32>
    %131 = vector.extract_strided_slice %130 {offsets = [0, 0], sizes = [8, 16], strides = [1, 1]} : vector<8x32xf32> to vector<8x16xf32>
    %132 = vector.extract_strided_slice %130 {offsets = [0, 16], sizes = [8, 16], strides = [1, 1]} : vector<8x32xf32> to vector<8x16xf32>
    %133 = arith.mulf %131, %2 : vector<8x16xf32>
    %134 = arith.mulf %132, %3 : vector<8x16xf32>
    %135 = arith.subf %133, %134 : vector<8x16xf32>
    %136 = arith.mulf %132, %2 : vector<8x16xf32>
    %137 = arith.mulf %131, %3 : vector<8x16xf32>
    %138 = arith.addf %136, %137 : vector<8x16xf32>
    %139 = tpu.concatenate %135, %138 in 1 : vector<8x16xf32>, vector<8x16xf32> -> vector<8x32xf32>
    %cst_23 = arith.constant 0.176776692 : f32
    %140 = vector.broadcast %cst_23 : f32 to vector<8x32xf32>
    %141 = arith.mulf %139, %140 : vector<8x32xf32>
    %142 = arith.truncf %141 : vector<8x32xf32> to vector<8x32xbf16>
    %143 = vector.extract_strided_slice %7 {offsets = [0, 96], sizes = [8, 32], strides = [1, 1]} : vector<8x128xf32> to vector<8x32xf32>
    %144 = vector.extract_strided_slice %143 {offsets = [0, 0], sizes = [8, 16], strides = [1, 1]} : vector<8x32xf32> to vector<8x16xf32>
    %145 = vector.extract_strided_slice %143 {offsets = [0, 16], sizes = [8, 16], strides = [1, 1]} : vector<8x32xf32> to vector<8x16xf32>
    %146 = arith.mulf %144, %2 : vector<8x16xf32>
    %147 = arith.mulf %145, %3 : vector<8x16xf32>
    %148 = arith.subf %146, %147 : vector<8x16xf32>
    %149 = arith.mulf %145, %2 : vector<8x16xf32>
    %150 = arith.mulf %144, %3 : vector<8x16xf32>
    %151 = arith.addf %149, %150 : vector<8x16xf32>
    %152 = tpu.concatenate %148, %151 in 1 : vector<8x16xf32>, vector<8x16xf32> -> vector<8x32xf32>
    %153 = arith.truncf %152 : vector<8x32xf32> to vector<8x32xbf16>
    %154 = vector.extract_strided_slice %8 {offsets = [0, 96], sizes = [8, 32], strides = [1, 1]} : vector<8x128xbf16> to vector<8x32xbf16>
    %cst_24 = arith.constant dense<0.000000e+00> : vector<8x8xf32>
    %155 = tpu.matmul %142, %153, %cst_24 {dimension_numbers = #tpu.dot_dimension_numbers<[1], [1], [0], [0], [0, 0, 1, 0], [], []>} : vector<8x32xbf16>, vector<8x32xbf16>, vector<8x8xf32> -> vector<8x8xf32>
    %156 = arith.addf %155, %12 : vector<8x8xf32>
    %cst_25 = arith.constant dense<0xFF800000> : vector<8xf32>
    %157 = vector.multi_reduction <maximumf>, %156, %cst_25 [1] : vector<8x8xf32> to vector<8xf32>
    %158 = vector.shape_cast %157 : vector<8xf32> to vector<8x1xf32>
    %159 = vector.broadcast %158 : vector<8x1xf32> to vector<8x8xf32>
    %160 = arith.subf %156, %159 : vector<8x8xf32>
    %161 = math.exp %160 : vector<8x8xf32>
    %cst_26 = arith.constant dense<0.000000e+00> : vector<8xf32>
    %162 = vector.multi_reduction <add>, %161, %cst_26 [1] : vector<8x8xf32> to vector<8xf32>
    %163 = vector.shape_cast %162 : vector<8xf32> to vector<8x1xf32>
    %164 = arith.truncf %161 : vector<8x8xf32> to vector<8x8xbf16>
    %cst_27 = arith.constant dense<0.000000e+00> : vector<8x32xf32>
    %165 = tpu.matmul %164, %154, %cst_27 {dimension_numbers = #tpu.dot_dimension_numbers<[1], [0], [0], [1], [0, 0, 1, 1], [], []>} : vector<8x8xbf16>, vector<8x32xbf16>, vector<8x32xf32> -> vector<8x32xf32>
    %166 = tpu.reciprocal %163 : vector<8x1xf32> -> vector<8x1xf32>
    %167 = vector.broadcast %166 : vector<8x1xf32> to vector<8x32xf32>
    %168 = arith.mulf %165, %167 : vector<8x32xf32>
    %169 = tpu.concatenate %51, %90, %129, %168 in 1 : vector<8x32xf32>, vector<8x32xf32>, vector<8x32xf32>, vector<8x32xf32> -> vector<8x128xf32>
    %170 = arith.truncf %169 : vector<8x128xf32> to vector<8x128xbf16>
    %c0_28 = arith.constant 0 : index
    %c0_29 = arith.constant 0 : index
    %171 = vector.load %arg6[%c0_28, %c0_29] : memref<128x128xbf16, #tpu.memory_space<vmem>>, vector<128x128xbf16>
    %cst_30 = arith.constant dense<0.000000e+00> : vector<8x128xf32>
    %172 = tpu.matmul %170, %171, %cst_30 {dimension_numbers = #tpu.dot_dimension_numbers<[1], [0], [0], [1], [0, 0, 1, 1], [], []>} : vector<8x128xbf16>, vector<128x128xbf16>, vector<8x128xf32> -> vector<8x128xf32>
    %c0_31 = arith.constant 0 : index
    %c0_32 = arith.constant 0 : index
    %173 = vector.load %arg7[%c0_31, %c0_32] : memref<1x128xf32, #tpu.memory_space<vmem>>, vector<1x128xf32>
    %174 = vector.broadcast %173 : vector<1x128xf32> to vector<8x128xf32>
    %175 = arith.addf %172, %174 : vector<8x128xf32>
    %c0_33 = arith.constant 0 : index
    %c0_34 = arith.constant 0 : index
    %c0_35 = arith.constant 0 : index
    %176 = vector.load %arg8[%c0_33, %c0_34, %c0_35] : memref<1x8x128xf32, #tpu.memory_space<vmem>>, vector<1x8x128xf32>
    %177 = vector.shape_cast %176 : vector<1x8x128xf32> to vector<8x128xf32>
    %178 = vector.shape_cast %175 : vector<8x128xf32> to vector<1x8x128xf32>
    tpu.vector_store %arg8[%c0_33, %c0_34, %c0_35], %178 {strides = array<i32>} : memref<1x8x128xf32, #tpu.memory_space<vmem>>, vector<1x8x128xf32>,
    return
  }
  func.func @transform_0(%arg0: i32, %arg1: i32) -> (i32, i32, i32) {
    %c0_i32 = arith.constant 0 : i32
    %c0_i32_0 = arith.constant 0 : i32
    %c0_i32_1 = arith.constant 0 : i32
    return %arg0, %c0_i32, %c0_i32_0 : i32, i32, i32
  }
  func.func @transform_1(%arg0: i32, %arg1: i32) -> (i32, i32) {
    %c0_i32 = arith.constant 0 : i32
    %c0_i32_0 = arith.constant 0 : i32
    %c0_i32_1 = arith.constant 0 : i32
    return %c0_i32, %c0_i32_0 : i32, i32
  }
  func.func @transform_2(%arg0: i32, %arg1: i32) -> (i32, i32) {
    %c0_i32 = arith.constant 0 : i32
    %c0_i32_0 = arith.constant 0 : i32
    %c0_i32_1 = arith.constant 0 : i32
    return %c0_i32, %c0_i32_0 : i32, i32
  }
  func.func @transform_3(%arg0: i32, %arg1: i32) -> (i32, i32, i32) {
    %c0_i32 = arith.constant 0 : i32
    %c0_i32_0 = arith.constant 0 : i32
    %c0_i32_1 = arith.constant 0 : i32
    return %arg0, %c0_i32, %c0_i32_0 : i32, i32, i32
  }
  func.func @transform_4(%arg0: i32, %arg1: i32) -> (i32, i32) {
    %c0_i32 = arith.constant 0 : i32
    %c0_i32_0 = arith.constant 0 : i32
    %c0_i32_1 = arith.constant 0 : i32
    return %c0_i32, %c0_i32_0 : i32, i32
  }
  func.func @transform_5(%arg0: i32, %arg1: i32) -> (i32, i32) {
    %c0_i32 = arith.constant 0 : i32
    %c0_i32_0 = arith.constant 0 : i32
    %c0_i32_1 = arith.constant 0 : i32
    return %c0_i32, %c0_i32_0 : i32, i32
  }
  func.func @transform_6(%arg0: i32, %arg1: i32) -> (i32, i32, i32) {
    %c0_i32 = arith.constant 0 : i32
    %c0_i32_0 = arith.constant 0 : i32
    return %arg0, %arg1, %c0_i32 : i32, i32, i32
  }
}

module attributes {stable_mosaic.version = 11 : i64} {
  func.func @_fused_rope_attn_wo_kernel(%arg0: i32, %arg1: i32, %arg2: memref<1x8x384xbf16, #tpu.memory_space<vmem>>, %arg3: memref<8x16xf32, #tpu.memory_space<vmem>>, %arg4: memref<8x16xf32, #tpu.memory_space<vmem>>, %arg5: memref<1x1x8xf32, #tpu.memory_space<vmem>>, %arg6: memref<128x128xbf16, #tpu.memory_space<vmem>>, %arg7: memref<1x128xf32, #tpu.memory_space<vmem>>, %arg8: memref<1x8x128xf32, #tpu.memory_space<vmem>>) attributes {dimension_semantics = [#tpu.dimension_semantics<parallel>, #tpu.dimension_semantics<parallel>], iteration_bounds = array<i64: 2, 1>, scalar_prefetch = 0 : i64, scratch_operands = 0 : i64, tpu.core_type = #tpu.core_type<tc>, window_params = [{transform_indices = @transform_0, window_bounds = array<i64: 1, 8, 384>}, {pipeline_mode = #tpu.pipeline_mode<synchronous>, transform_indices = @transform_1, window_bounds = array<i64: 8, 16>}, {pipeline_mode = #tpu.pipeline_mode<synchronous>, transform_indices = @transform_2, window_bounds = array<i64: 8, 16>}, {transform_indices = @transform_3, window_bounds = array<i64: 1, 1, 8>}, {pipeline_mode = #tpu.pipeline_mode<synchronous>, transform_indices = @transform_4, window_bounds = array<i64: 128, 128>}, {pipeline_mode = #tpu.pipeline_mode<synchronous>, transform_indices = @transform_5, window_bounds = array<i64: 1, 128>}, {transform_indices = @transform_6, window_bounds = array<i64: 1, 8, 128>}]} {
    %c0 = arith.constant 0 : index
    %c0_0 = arith.constant 0 : index
    %c0_1 = arith.constant 0 : index
    %0 = vector.load %arg2[%c0, %c0_0, %c0_1] : memref<1x8x384xbf16, #tpu.memory_space<vmem>>, vector<1x8x384xbf16>
    %1 = vector.shape_cast %0 : vector<1x8x384xbf16> to vector<8x384xbf16>
    %c0_2 = arith.constant 0 : index
    %c0_3 = arith.constant 0 : index
    %2 = vector.load %arg3[%c0_2, %c0_3] : memref<8x16xf32, #tpu.memory_space<vmem>>, vector<8x16xf32>
    %c0_4 = arith.constant 0 : index
    %c0_5 = arith.constant 0 : index
    %3 = vector.load %arg4[%c0_4, %c0_5] : memref<8x16xf32, #tpu.memory_space<vmem>>, vector<8x16xf32>
    %4 = vector.extract_strided_slice %1 {offsets = [0, 0], sizes = [8, 128], strides = [1, 1]} : vector<8x384xbf16> to vector<8x128xbf16>
    %5 = arith.extf %4 : vector<8x128xbf16> to vector<8x128xf32>
    %6 = vector.extract_strided_slice %1 {offsets = [0, 128], sizes = [8, 128], strides = [1, 1]} : vector<8x384xbf16> to vector<8x128xbf16>
    %7 = arith.extf %6 : vector<8x128xbf16> to vector<8x128xf32>
    %8 = vector.extract_strided_slice %1 {offsets = [0, 256], sizes = [8, 128], strides = [1, 1]} : vector<8x384xbf16> to vector<8x128xbf16>
    %c0_6 = arith.constant 0 : index
    %c0_7 = arith.constant 0 : index
    %c0_8 = arith.constant 0 : index
    %9 = vector.load %arg5[%c0_6, %c0_7, %c0_8] : memref<1x1x8xf32, #tpu.memory_space<vmem>>, vector<1x1x8xf32>
    %10 = vector.shape_cast %9 : vector<1x1x8xf32> to vector<1x8xf32>
    %11 = vector.shape_cast %10 : vector<1x8xf32> to vector<1x8xf32>
    %12 = vector.broadcast %11 : vector<1x8xf32> to vector<8x8xf32>
    %13 = vector.extract_strided_slice %5 {offsets = [0, 0], sizes = [8, 32], strides = [1, 1]} : vector<8x128xf32> to vector<8x32xf32>
    %14 = vector.extract_strided_slice %13 {offsets = [0, 0], sizes = [8, 16], strides = [1, 1]} : vector<8x32xf32> to vector<8x16xf32>
    %15 = vector.extract_strided_slice %13 {offsets = [0, 16], sizes = [8, 16], strides = [1, 1]} : vector<8x32xf32> to vector<8x16xf32>
    %16 = arith.mulf %14, %2 : vector<8x16xf32>
    %17 = arith.mulf %15, %3 : vector<8x16xf32>
    %18 = arith.subf %16, %17 : vector<8x16xf32>
    %19 = arith.mulf %15, %2 : vector<8x16xf32>
    %20 = arith.mulf %14, %3 : vector<8x16xf32>
    %21 = arith.addf %19, %20 : vector<8x16xf32>
    %22 = tpu.concatenate %18, %21 in 1 : vector<8x16xf32>, vector<8x16xf32> -> vector<8x32xf32>
    %cst = arith.constant 0.176776692 : f32
    %23 = vector.broadcast %cst : f32 to vector<8x32xf32>
    %24 = arith.mulf %22, %23 : vector<8x32xf32>
    %25 = arith.truncf %24 : vector<8x32xf32> to vector<8x32xbf16>
    %26 = vector.extract_strided_slice %7 {offsets = [0, 0], sizes = [8, 32], strides = [1, 1]} : vector<8x128xf32> to vector<8x32xf32>
    %27 = vector.extract_strided_slice %26 {offsets = [0, 0], sizes = [8, 16], strides = [1, 1]} : vector<8x32xf32> to vector<8x16xf32>
    %28 = vector.extract_strided_slice %26 {offsets = [0, 16], sizes = [8, 16], strides = [1, 1]} : vector<8x32xf32> to vector<8x16xf32>
    %29 = arith.mulf %27, %2 : vector<8x16xf32>
    %30 = arith.mulf %28, %3 : vector<8x16xf32>
    %31 = arith.subf %29, %30 : vector<8x16xf32>
    %32 = arith.mulf %28, %2 : vector<8x16xf32>
    %33 = arith.mulf %27, %3 : vector<8x16xf32>
    %34 = arith.addf %32, %33 : vector<8x16xf32>
    %35 = tpu.concatenate %31, %34 in 1 : vector<8x16xf32>, vector<8x16xf32> -> vector<8x32xf32>
    %36 = arith.truncf %35 : vector<8x32xf32> to vector<8x32xbf16>
    %37 = vector.extract_strided_slice %8 {offsets = [0, 0], sizes = [8, 32], strides = [1, 1]} : vector<8x128xbf16> to vector<8x32xbf16>
    %cst_9 = arith.constant dense<0.000000e+00> : vector<8x8xf32>
    %38 = tpu.matmul %25, %36, %cst_9 {dimension_numbers = #tpu.dot_dimension_numbers<[1], [1], [0], [0], [0, 0, 1, 0], [], []>} : vector<8x32xbf16>, vector<8x32xbf16>, vector<8x8xf32> -> vector<8x8xf32>
    %39 = arith.addf %38, %12 : vector<8x8xf32>
    %cst_10 = arith.constant dense<0xFF800000> : vector<8xf32>
    %40 = vector.multi_reduction <maximumf>, %39, %cst_10 [1] : vector<8x8xf32> to vector<8xf32>
    %41 = vector.shape_cast %40 : vector<8xf32> to vector<8x1xf32>
    %42 = vector.broadcast %41 : vector<8x1xf32> to vector<8x8xf32>
    %43 = arith.subf %39, %42 : vector<8x8xf32>
    %44 = math.exp %43 : vector<8x8xf32>
    %cst_11 = arith.constant dense<0.000000e+00> : vector<8xf32>
    %45 = vector.multi_reduction <add>, %44, %cst_11 [1] : vector<8x8xf32> to vector<8xf32>
    %46 = vector.shape_cast %45 : vector<8xf32> to vector<8x1xf32>
    %47 = arith.truncf %44 : vector<8x8xf32> to vector<8x8xbf16>
    %cst_12 = arith.constant dense<0.000000e+00> : vector<8x32xf32>
    %48 = tpu.matmul %47, %37, %cst_12 {dimension_numbers = #tpu.dot_dimension_numbers<[1], [0], [0], [1], [0, 0, 1, 1], [], []>} : vector<8x8xbf16>, vector<8x32xbf16>, vector<8x32xf32> -> vector<8x32xf32>
    %49 = tpu.reciprocal %46 : vector<8x1xf32> -> vector<8x1xf32>
    %50 = vector.broadcast %49 : vector<8x1xf32> to vector<8x32xf32>
    %51 = arith.mulf %48, %50 : vector<8x32xf32>
    %52 = vector.extract_strided_slice %5 {offsets = [0, 32], sizes = [8, 32], strides = [1, 1]} : vector<8x128xf32> to vector<8x32xf32>
    %53 = vector.extract_strided_slice %52 {offsets = [0, 0], sizes = [8, 16], strides = [1, 1]} : vector<8x32xf32> to vector<8x16xf32>
    %54 = vector.extract_strided_slice %52 {offsets = [0, 16], sizes = [8, 16], strides = [1, 1]} : vector<8x32xf32> to vector<8x16xf32>
    %55 = arith.mulf %53, %2 : vector<8x16xf32>
    %56 = arith.mulf %54, %3 : vector<8x16xf32>
    %57 = arith.subf %55, %56 : vector<8x16xf32>
    %58 = arith.mulf %54, %2 : vector<8x16xf32>
    %59 = arith.mulf %53, %3 : vector<8x16xf32>
    %60 = arith.addf %58, %59 : vector<8x16xf32>
    %61 = tpu.concatenate %57, %60 in 1 : vector<8x16xf32>, vector<8x16xf32> -> vector<8x32xf32>
    %cst_13 = arith.constant 0.176776692 : f32
    %62 = vector.broadcast %cst_13 : f32 to vector<8x32xf32>
    %63 = arith.mulf %61, %62 : vector<8x32xf32>
    %64 = arith.truncf %63 : vector<8x32xf32> to vector<8x32xbf16>
    %65 = vector.extract_strided_slice %7 {offsets = [0, 32], sizes = [8, 32], strides = [1, 1]} : vector<8x128xf32> to vector<8x32xf32>
    %66 = vector.extract_strided_slice %65 {offsets = [0, 0], sizes = [8, 16], strides = [1, 1]} : vector<8x32xf32> to vector<8x16xf32>
    %67 = vector.extract_strided_slice %65 {offsets = [0, 16], sizes = [8, 16], strides = [1, 1]} : vector<8x32xf32> to vector<8x16xf32>
    %68 = arith.mulf %66, %2 : vector<8x16xf32>
    %69 = arith.mulf %67, %3 : vector<8x16xf32>
    %70 = arith.subf %68, %69 : vector<8x16xf32>
    %71 = arith.mulf %67, %2 : vector<8x16xf32>
    %72 = arith.mulf %66, %3 : vector<8x16xf32>
    %73 = arith.addf %71, %72 : vector<8x16xf32>
    %74 = tpu.concatenate %70, %73 in 1 : vector<8x16xf32>, vector<8x16xf32> -> vector<8x32xf32>
    %75 = arith.truncf %74 : vector<8x32xf32> to vector<8x32xbf16>
    %76 = vector.extract_strided_slice %8 {offsets = [0, 32], sizes = [8, 32], strides = [1, 1]} : vector<8x128xbf16> to vector<8x32xbf16>
    %cst_14 = arith.constant dense<0.000000e+00> : vector<8x8xf32>
    %77 = tpu.matmul %64, %75, %cst_14 {dimension_numbers = #tpu.dot_dimension_numbers<[1], [1], [0], [0], [0, 0, 1, 0], [], []>} : vector<8x32xbf16>, vector<8x32xbf16>, vector<8x8xf32> -> vector<8x8xf32>
    %78 = arith.addf %77, %12 : vector<8x8xf32>
    %cst_15 = arith.constant dense<0xFF800000> : vector<8xf32>
    %79 = vector.multi_reduction <maximumf>, %78, %cst_15 [1] : vector<8x8xf32> to vector<8xf32>
    %80 = vector.shape_cast %79 : vector<8xf32> to vector<8x1xf32>
    %81 = vector.broadcast %80 : vector<8x1xf32> to vector<8x8xf32>
    %82 = arith.subf %78, %81 : vector<8x8xf32>
    %83 = math.exp %82 : vector<8x8xf32>
    %cst_16 = arith.constant dense<0.000000e+00> : vector<8xf32>
    %84 = vector.multi_reduction <add>, %83, %cst_16 [1] : vector<8x8xf32> to vector<8xf32>
    %85 = vector.shape_cast %84 : vector<8xf32> to vector<8x1xf32>
    %86 = arith.truncf %83 : vector<8x8xf32> to vector<8x8xbf16>
    %cst_17 = arith.constant dense<0.000000e+00> : vector<8x32xf32>
    %87 = tpu.matmul %86, %76, %cst_17 {dimension_numbers = #tpu.dot_dimension_numbers<[1], [0], [0], [1], [0, 0, 1, 1], [], []>} : vector<8x8xbf16>, vector<8x32xbf16>, vector<8x32xf32> -> vector<8x32xf32>
    %88 = tpu.reciprocal %85 : vector<8x1xf32> -> vector<8x1xf32>
    %89 = vector.broadcast %88 : vector<8x1xf32> to vector<8x32xf32>
    %90 = arith.mulf %87, %89 : vector<8x32xf32>
    %91 = vector.extract_strided_slice %5 {offsets = [0, 64], sizes = [8, 32], strides = [1, 1]} : vector<8x128xf32> to vector<8x32xf32>
    %92 = vector.extract_strided_slice %91 {offsets = [0, 0], sizes = [8, 16], strides = [1, 1]} : vector<8x32xf32> to vector<8x16xf32>
    %93 = vector.extract_strided_slice %91 {offsets = [0, 16], sizes = [8, 16], strides = [1, 1]} : vector<8x32xf32> to vector<8x16xf32>
    %94 = arith.mulf %92, %2 : vector<8x16xf32>
    %95 = arith.mulf %93, %3 : vector<8x16xf32>
    %96 = arith.subf %94, %95 : vector<8x16xf32>
    %97 = arith.mulf %93, %2 : vector<8x16xf32>
    %98 = arith.mulf %92, %3 : vector<8x16xf32>
    %99 = arith.addf %97, %98 : vector<8x16xf32>
    %100 = tpu.concatenate %96, %99 in 1 : vector<8x16xf32>, vector<8x16xf32> -> vector<8x32xf32>
    %cst_18 = arith.constant 0.176776692 : f32
    %101 = vector.broadcast %cst_18 : f32 to vector<8x32xf32>
    %102 = arith.mulf %100, %101 : vector<8x32xf32>
    %103 = arith.truncf %102 : vector<8x32xf32> to vector<8x32xbf16>
    %104 = vector.extract_strided_slice %7 {offsets = [0, 64], sizes = [8, 32], strides = [1, 1]} : vector<8x128xf32> to vector<8x32xf32>
    %105 = vector.extract_strided_slice %104 {offsets = [0, 0], sizes = [8, 16], strides = [1, 1]} : vector<8x32xf32> to vector<8x16xf32>
    %106 = vector.extract_strided_slice %104 {offsets = [0, 16], sizes = [8, 16], strides = [1, 1]} : vector<8x32xf32> to vector<8x16xf32>
    %107 = arith.mulf %105, %2 : vector<8x16xf32>
    %108 = arith.mulf %106, %3 : vector<8x16xf32>
    %109 = arith.subf %107, %108 : vector<8x16xf32>
    %110 = arith.mulf %106, %2 : vector<8x16xf32>
    %111 = arith.mulf %105, %3 : vector<8x16xf32>
    %112 = arith.addf %110, %111 : vector<8x16xf32>
    %113 = tpu.concatenate %109, %112 in 1 : vector<8x16xf32>, vector<8x16xf32> -> vector<8x32xf32>
    %114 = arith.truncf %113 : vector<8x32xf32> to vector<8x32xbf16>
    %115 = vector.extract_strided_slice %8 {offsets = [0, 64], sizes = [8, 32], strides = [1, 1]} : vector<8x128xbf16> to vector<8x32xbf16>
    %cst_19 = arith.constant dense<0.000000e+00> : vector<8x8xf32>
    %116 = tpu.matmul %103, %114, %cst_19 {dimension_numbers = #tpu.dot_dimension_numbers<[1], [1], [0], [0], [0, 0, 1, 0], [], []>} : vector<8x32xbf16>, vector<8x32xbf16>, vector<8x8xf32> -> vector<8x8xf32>
    %117 = arith.addf %116, %12 : vector<8x8xf32>
    %cst_20 = arith.constant dense<0xFF800000> : vector<8xf32>
    %118 = vector.multi_reduction <maximumf>, %117, %cst_20 [1] : vector<8x8xf32> to vector<8xf32>
    %119 = vector.shape_cast %118 : vector<8xf32> to vector<8x1xf32>
    %120 = vector.broadcast %119 : vector<8x1xf32> to vector<8x8xf32>
    %121 = arith.subf %117, %120 : vector<8x8xf32>
    %122 = math.exp %121 : vector<8x8xf32>
    %cst_21 = arith.constant dense<0.000000e+00> : vector<8xf32>
    %123 = vector.multi_reduction <add>, %122, %cst_21 [1] : vector<8x8xf32> to vector<8xf32>
    %124 = vector.shape_cast %123 : vector<8xf32> to vector<8x1xf32>
    %125 = arith.truncf %122 : vector<8x8xf32> to vector<8x8xbf16>
    %cst_22 = arith.constant dense<0.000000e+00> : vector<8x32xf32>
    %126 = tpu.matmul %125, %115, %cst_22 {dimension_numbers = #tpu.dot_dimension_numbers<[1], [0], [0], [1], [0, 0, 1, 1], [], []>} : vector<8x8xbf16>, vector<8x32xbf16>, vector<8x32xf32> -> vector<8x32xf32>
    %127 = tpu.reciprocal %124 : vector<8x1xf32> -> vector<8x1xf32>
    %128 = vector.broadcast %127 : vector<8x1xf32> to vector<8x32xf32>
    %129 = arith.mulf %126, %128 : vector<8x32xf32>
    %130 = vector.extract_strided_slice %5 {offsets = [0, 96], sizes = [8, 32], strides = [1, 1]} : vector<8x128xf32> to vector<8x32xf32>
    %131 = vector.extract_strided_slice %130 {offsets = [0, 0], sizes = [8, 16], strides = [1, 1]} : vector<8x32xf32> to vector<8x16xf32>
    %132 = vector.extract_strided_slice %130 {offsets = [0, 16], sizes = [8, 16], strides = [1, 1]} : vector<8x32xf32> to vector<8x16xf32>
    %133 = arith.mulf %131, %2 : vector<8x16xf32>
    %134 = arith.mulf %132, %3 : vector<8x16xf32>
    %135 = arith.subf %133, %134 : vector<8x16xf32>
    %136 = arith.mulf %132, %2 : vector<8x16xf32>
    %137 = arith.mulf %131, %3 : vector<8x16xf32>
    %138 = arith.addf %136, %137 : vector<8x16xf32>
    %139 = tpu.concatenate %135, %138 in 1 : vector<8x16xf32>, vector<8x16xf32> -> vector<8x32xf32>
    %cst_23 = arith.constant 0.176776692 : f32
    %140 = vector.broadcast %cst_23 : f32 to vector<8x32xf32>
    %141 = arith.mulf %139, %140 : vector<8x32xf32>
    %142 = arith.truncf %141 : vector<8x32xf32> to vector<8x32xbf16>
    %143 = vector.extract_strided_slice %7 {offsets = [0, 96], sizes = [8, 32], strides = [1, 1]} : vector<8x128xf32> to vector<8x32xf32>
    %144 = vector.extract_strided_slice %143 {offsets = [0, 0], sizes = [8, 16], strides = [1, 1]} : vector<8x32xf32> to vector<8x16xf32>
    %145 = vector.extract_strided_slice %143 {offsets = [0, 16], sizes = [8, 16], strides = [1, 1]} : vector<8x32xf32> to vector<8x16xf32>
    %146 = arith.mulf %144, %2 : vector<8x16xf32>
    %147 = arith.mulf %145, %3 : vector<8x16xf32>
    %148 = arith.subf %146, %147 : vector<8x16xf32>
    %149 = arith.mulf %145, %2 : vector<8x16xf32>
    %150 = arith.mulf %144, %3 : vector<8x16xf32>
    %151 = arith.addf %149, %150 : vector<8x16xf32>
    %152 = tpu.concatenate %148, %151 in 1 : vector<8x16xf32>, vector<8x16xf32> -> vector<8x32xf32>
    %153 = arith.truncf %152 : vector<8x32xf32> to vector<8x32xbf16>
    %154 = vector.extract_strided_slice %8 {offsets = [0, 96], sizes = [8, 32], strides = [1, 1]} : vector<8x128xbf16> to vector<8x32xbf16>
    %cst_24 = arith.constant dense<0.000000e+00> : vector<8x8xf32>
    %155 = tpu.matmul %142, %153, %cst_24 {dimension_numbers = #tpu.dot_dimension_numbers<[1], [1], [0], [0], [0, 0, 1, 0], [], []>} : vector<8x32xbf16>, vector<8x32xbf16>, vector<8x8xf32> -> vector<8x8xf32>
    %156 = arith.addf %155, %12 : vector<8x8xf32>
    %cst_25 = arith.constant dense<0xFF800000> : vector<8xf32>
    %157 = vector.multi_reduction <maximumf>, %156, %cst_25 [1] : vector<8x8xf32> to vector<8xf32>
    %158 = vector.shape_cast %157 : vector<8xf32> to vector<8x1xf32>
    %159 = vector.broadcast %158 : vector<8x1xf32> to vector<8x8xf32>
    %160 = arith.subf %156, %159 : vector<8x8xf32>
    %161 = math.exp %160 : vector<8x8xf32>
    %cst_26 = arith.constant dense<0.000000e+00> : vector<8xf32>
    %162 = vector.multi_reduction <add>, %161, %cst_26 [1] : vector<8x8xf32> to vector<8xf32>
    %163 = vector.shape_cast %162 : vector<8xf32> to vector<8x1xf32>
    %164 = arith.truncf %161 : vector<8x8xf32> to vector<8x8xbf16>
    %cst_27 = arith.constant dense<0.000000e+00> : vector<8x32xf32>
    %165 = tpu.matmul %164, %154, %cst_27 {dimension_numbers = #tpu.dot_dimension_numbers<[1], [0], [0], [1], [0, 0, 1, 1], [], []>} : vector<8x8xbf16>, vector<8x32xbf16>, vector<8x32xf32> -> vector<8x32xf32>
    %166 = tpu.reciprocal %163 : vector<8x1xf32> -> vector<8x1xf32>
    %167 = vector.broadcast %166 : vector<8x1xf32> to vector<8x32xf32>
    %168 = arith.mulf %165, %167 : vector<8x32xf32>
    %169 = tpu.concatenate %51, %90, %129, %168 in 1 : vector<8x32xf32>, vector<8x32xf32>, vector<8x32xf32>, vector<8x32xf32> -> vector<8x128xf32>
    %170 = arith.truncf %169 : vector<8x128xf32> to vector<8x128xbf16>
    %c0_28 = arith.constant 0 : index
    %c0_29 = arith.constant 0 : index
    %171 = vector.load %arg6[%c0_28, %c0_29] : memref<128x128xbf16, #tpu.memory_space<vmem>>, vector<128x128xbf16>
    %cst_30 = arith.constant dense<0.000000e+00> : vector<8x128xf32>
    %172 = tpu.matmul %170, %171, %cst_30 {dimension_numbers = #tpu.dot_dimension_numbers<[1], [0], [0], [1], [0, 0, 1, 1], [], []>} : vector<8x128xbf16>, vector<128x128xbf16>, vector<8x128xf32> -> vector<8x128xf32>
    %c0_31 = arith.constant 0 : index
    %c0_32 = arith.constant 0 : index
    %173 = vector.load %arg7[%c0_31, %c0_32] : memref<1x128xf32, #tpu.memory_space<vmem>>, vector<1x128xf32>
    %174 = vector.broadcast %173 : vector<1x128xf32> to vector<8x128xf32>
    %175 = arith.addf %172, %174 : vector<8x128xf32>
    %c0_33 = arith.constant 0 : index
    %c0_34 = arith.constant 0 : index
    %c0_35 = arith.constant 0 : index
    %176 = vector.load %arg8[%c0_33, %c0_34, %c0_35] : memref<1x8x128xf32, #tpu.memory_space<vmem>>, vector<1x8x128xf32>
    %177 = vector.shape_cast %176 : vector<1x8x128xf32> to vector<8x128xf32>
    %178 = vector.shape_cast %175 : vector<8x128xf32> to vector<1x8x128xf32>
    tpu.vector_store %arg8[%c0_33, %c0_34, %c0_35], %178 {strides = array<i32>} : memref<1x8x128xf32, #tpu.memory_space<vmem>>, vector<1x8x128xf32>,
    return
  }
  func.func @transform_0(%arg0: i32, %arg1: i32) -> (i32, i32, i32) {
    %c0_i32 = arith.constant 0 : i32
    %c0_i32_0 = arith.constant 0 : i32
    %c0_i32_1 = arith.constant 0 : i32
    return %arg0, %c0_i32, %c0_i32_0 : i32, i32, i32
  }
  func.func @transform_1(%arg0: i32, %arg1: i32) -> (i32, i32) {
    %c0_i32 = arith.constant 0 : i32
    %c0_i32_0 = arith.constant 0 : i32
    %c0_i32_1 = arith.constant 0 : i32
    return %c0_i32, %c0_i32_0 : i32, i32
  }
  func.func @transform_2(%arg0: i32, %arg1: i32) -> (i32, i32) {
    %c0_i32 = arith.constant 0 : i32
    %c0_i32_0 = arith.constant 0 : i32
    %c0_i32_1 = arith.constant 0 : i32
    return %c0_i32, %c0_i32_0 : i32, i32
  }
  func.func @transform_3(%arg0: i32, %arg1: i32) -> (i32, i32, i32) {
    %c0_i32 = arith.constant 0 : i32
    %c0_i32_0 = arith.constant 0 : i32
    %c0_i32_1 = arith.constant 0 : i32
    return %arg0, %c0_i32, %c0_i32_0 : i32, i32, i32
  }
  func.func @transform_4(%arg0: i32, %arg1: i32) -> (i32, i32) {
    %c0_i32 = arith.constant 0 : i32
    %c0_i32_0 = arith.constant 0 : i32
    %c0_i32_1 = arith.constant 0 : i32
    return %c0_i32, %c0_i32_0 : i32, i32
  }
  func.func @transform_5(%arg0: i32, %arg1: i32) -> (i32, i32) {
    %c0_i32 = arith.constant 0 : i32
    %c0_i32_0 = arith.constant 0 : i32
    %c0_i32_1 = arith.constant 0 : i32
    return %c0_i32, %c0_i32_0 : i32, i32
  }
  func.func @transform_6(%arg0: i32, %arg1: i32) -> (i32, i32, i32) {
    %c0_i32 = arith.constant 0 : i32
    %c0_i32_0 = arith.constant 0 : i32
    return %arg0, %arg1, %c0_i32 : i32, i32, i32
  }
}

</mosaic_0001>

<llo_original>
// kernel: tpu_custom_call.1
$region0: #{tpu_custom_call.1}
  #allocation0 [shape = 'u32[]', space=smem, size = 0x4, offset = 0x4, fixed_abs, tag = 'smem constant byte address 0x4 - core index']
  #allocation1 [shape = 'u32[144,128]{1,0:T(1,128)}', space=vmem, size = 0x12000, scoped, tag = 'internal scratch']
  %s0 = inlined_call_operand.hbm [shape: bf16[2,8,384], index: 0, kind: input, shape index: {}]
  %s1 = inlined_call_operand.hbm [shape: f32[8,16], index: 1, kind: input, shape index: {}]
  %s2 = inlined_call_operand.hbm [shape: f32[8,16], index: 2, kind: input, shape index: {}]
  %s3 = inlined_call_operand.vmem [shape: f32[2,1,8], index: 3, kind: input, shape index: {}]
  %s4 = inlined_call_operand.hbm [shape: bf16[128,128], index: 4, kind: input, shape index: {}]
  %s5 = inlined_call_operand.vmem [shape: f32[1,128], index: 5, kind: input, shape index: {}]
  %s6 = inlined_call_operand.hbm [shape: f32[2,8,128], index: 6, kind: output, shape index: {}]
  %s7 = sld [smem:[#allocation0]]
  $region73: #{tpu_custom_call.1} parent=0
    _
  %s9 = ssub.s32 1, %s7
  %s10 = scalar_select 0, %s9, %s7
  $region1: #{tpu_custom_call.1} parent=0
    #allocation2 [shape = 'u8[12288]{0}', space=vmem, size = 0x3000, scoped, tag = 'input window, operand 0']
    #allocation3 [shape = 's32[2]{0}', space=sflag, size = 0x8, scoped, tag = 'scoped memory for tpu_custom_call.1']
    #allocation4 [shape = 's32[2]{0}', space=sflag, size = 0x8, scoped, tag = 'scoped memory for tpu_custom_call.1']
    #allocation5 [shape = 'u8[4096]{0}', space=vmem, size = 0x1000, scoped, tag = 'input window, operand 1, single buffered']
    #allocation6 [shape = 's32[1]{0}', space=sflag, size = 0x4, scoped, tag = 'scoped memory for tpu_custom_call.1']
    #allocation7 [shape = 'u8[4096]{0}', space=vmem, size = 0x1000, scoped, tag = 'input window, operand 2, single buffered']
    #allocation8 [shape = 'u8[32768]{0}', space=vmem, size = 0x8000, scoped, tag = 'input window, operand 4, single buffered']
    #allocation9 [shape = 's32[1]{0}', space=sflag, size = 0x4, scoped, tag = 'scoped memory for tpu_custom_call.1']
    #allocation10 [shape = 'u8[8192]{0}', space=vmem, size = 0x2000, scoped, tag = 'output window, operand 0']
    %11 = vsyncpa [#allocation3], 0
    %s12 = scalar_lea.sflag [#allocation3], 1
    %13 = vsyncpa %s12, 0
    %14 = vsyncpa [#allocation6], 0
    %15 = vsyncpa [#allocation9], 0
    %16 = vsyncpa [#allocation4], 0
    %s17 = scalar_lea.sflag [#allocation4], 1
    %18 = vsyncpa %s17, 0
    loop: start=0, step=1, limit=4
    $region2: #{tpu_custom_call.1} parent=1 // loop_pre_header
      _
    $region3: #{tpu_custom_call.1} parent=1 // loop_header
      %s20 = sphi 0, %s24
      %p21 = scmp.ge.s32.totalorder %s20, 4
      %s27 = sphi 0, %s39
      %s28 = sphi 0, %s35
      %s29 = sphi 0, %s27
      %s30 = sphi 0, %s28
      %s31 = sphi 0, %s29
      %s32 = sphi 0, %s30
      %s42 = sphi 0, %s44
      %s45 = sphi 0, %s42
      %s46 = sphi 0, %s45
      %s62 = sphi 0, %s46
      %s66 = sphi 0, %s66
      %s68 = sphi 0, %s66
      %s69 = sphi 0, %s68
      %s83 = sphi 0, %s69
      %s87 = sphi 0, %s87
      %s89 = sphi 0, %s87
      %s90 = sphi 0, %s89
      %s104 = sphi 0, %s90
      %s110 = sphi 0, %s112
      %s113 = sphi 0, %s110
      %s114 = sphi 0, %s113
      %s130 = sphi 0, %s114
      %s134 = sphi 0, %s134
      %s136 = sphi 0, %s134
      %s137 = sphi 0, %s136
      %s151 = sphi 0, %s137
      %s155 = sphi 0, %s155
      %s157 = sphi 0, %s155
      %s158 = sphi 0, %s157
      %s172 = sphi 0, %s158
      %s180 = sphi 0, %s182
      %s183 = sphi 0, %s180
      %s184 = sphi 0, %s183
      %s200 = sphi 0, %s184
    $region4: #{tpu_custom_call.1} parent=1 // loop_header_branch
      %23 = sbr.rel (%p21) target = $region8
    $region5: #{tpu_custom_call.1} parent=1 // loop_body
      %s25 = ssub.s32 %s20, 1
      %s26 = ssub.s32 %s20, 2
      %s33 = sadd.s32 1, %s28
      %p34 = scmp.ge.s32.totalorder %s33, 1
      %s35 = scalar_select %p34, 0, %s33
      %s36 = sadd.s32 1, %s27
      %s37 = scalar_select %p34, %s36, %s27
      %p38 = scmp.ge.s32.totalorder %s37, 2
      %s39 = scalar_select %p38, 0, %s37
      %s40 = ssub.s32 %s27, %s39
      %p41 = scmp.eq.s32.totalorder %s40, 0
      %s43 = sadd.s32 %s42, 1
      %s44 = scalar_select %p41, %s42, %s43
      %p47 = pneg %p41
      %p48 = scmp.eq.s32.totalorder %s20, 1
      %p49 = por %p47, %p48
      %p50 = scmp.ne.s32.totalorder %s42, %s45
      %p51 = scmp.eq.s32.totalorder %s20, 0
      %p52 = por %p50, %p51
      %p53 = scmp.ne.s32.totalorder %s42, %s45
      %p54 = scmp.eq.s32.totalorder %s25, 1
      %p55 = por %p53, %p54
      %p56 = scmp.ne.s32.totalorder %s45, %s46
      %p57 = scmp.eq.s32.totalorder %s25, 0
      %p58 = por %p56, %p57
      %p59 = scmp.ne.s32.totalorder %s45, %s46
      %p60 = scmp.eq.s32.totalorder %s26, 1
      %p61 = por %p59, %p60
      %p63 = scmp.ne.s32.totalorder %s46, %s62
      %p64 = scmp.eq.s32.totalorder %s26, 0
      %p65 = por %p63, %p64
      %s67 = sadd.s32 %s66, 1
      %p70 = scmp.eq.s32.totalorder %s20, 1
      %p71 = scmp.ne.s32.totalorder %s66, %s68
      %p72 = scmp.eq.s32.totalorder %s20, 0
      %p73 = por %p71, %p72
      %p74 = scmp.ne.s32.totalorder %s66, %s68
      %p75 = scmp.eq.s32.totalorder %s25, 1
      %p76 = por %p74, %p75
      %p77 = scmp.ne.s32.totalorder %s68, %s69
      %p78 = scmp.eq.s32.totalorder %s25, 0
      %p79 = por %p77, %p78
      %p80 = scmp.ne.s32.totalorder %s68, %s69
      %p81 = scmp.eq.s32.totalorder %s26, 1
      %p82 = por %p80, %p81
      %p84 = scmp.ne.s32.totalorder %s69, %s83
      %p85 = scmp.eq.s32.totalorder %s26, 0
      %p86 = por %p84, %p85
      %s88 = sadd.s32 %s87, 1
      %p91 = scmp.eq.s32.totalorder %s20, 1
      %p92 = scmp.ne.s32.totalorder %s87, %s89
      %p93 = scmp.eq.s32.totalorder %s20, 0
      %p94 = por %p92, %p93
      %p95 = scmp.ne.s32.totalorder %s87, %s89
      %p96 = scmp.eq.s32.totalorder %s25, 1
      %p97 = por %p95, %p96
      %p98 = scmp.ne.s32.totalorder %s89, %s90
      %p99 = scmp.eq.s32.totalorder %s25, 0
      %p100 = por %p98, %p99
      %p101 = scmp.ne.s32.totalorder %s89, %s90
      %p102 = scmp.eq.s32.totalorder %s26, 1
      %p103 = por %p101, %p102
      %p105 = scmp.ne.s32.totalorder %s90, %s104
      %p106 = scmp.eq.s32.totalorder %s26, 0
      %p107 = por %p105, %p106
      %s108 = ssub.s32 %s27, %s39
      %p109 = scmp.eq.s32.totalorder %s108, 0
      %s111 = sadd.s32 %s110, 1
      %s112 = scalar_select %p109, %s110, %s111
      %p115 = pneg %p109
      %p116 = scmp.eq.s32.totalorder %s20, 1
      %p117 = por %p115, %p116
      %p118 = scmp.ne.s32.totalorder %s110, %s113
      %p119 = scmp.eq.s32.totalorder %s20, 0
      %p120 = por %p118, %p119
      %p121 = scmp.ne.s32.totalorder %s110, %s113
      %p122 = scmp.eq.s32.totalorder %s25, 1
      %p123 = por %p121, %p122
      %p124 = scmp.ne.s32.totalorder %s113, %s114
      %p125 = scmp.eq.s32.totalorder %s25, 0
      %p126 = por %p124, %p125
      %p127 = scmp.ne.s32.totalorder %s113, %s114
      %p128 = scmp.eq.s32.totalorder %s26, 1
      %p129 = por %p127, %p128
      %p131 = scmp.ne.s32.totalorder %s114, %s130
      %p132 = scmp.eq.s32.totalorder %s26, 0
      %p133 = por %p131, %p132
      %s135 = sadd.s32 %s134, 1
      %p138 = scmp.eq.s32.totalorder %s20, 1
      %p139 = scmp.ne.s32.totalorder %s134, %s136
      %p140 = scmp.eq.s32.totalorder %s20, 0
      %p141 = por %p139, %p140
      %p142 = scmp.ne.s32.totalorder %s134, %s136
      %p143 = scmp.eq.s32.totalorder %s25, 1
      %p144 = por %p142, %p143
      %p145 = scmp.ne.s32.totalorder %s136, %s137
      %p146 = scmp.eq.s32.totalorder %s25, 0
      %p147 = por %p145, %p146
      %p148 = scmp.ne.s32.totalorder %s136, %s137
      %p149 = scmp.eq.s32.totalorder %s26, 1
      %p150 = por %p148, %p149
      %p152 = scmp.ne.s32.totalorder %s137, %s151
      %p153 = scmp.eq.s32.totalorder %s26, 0
      %p154 = por %p152, %p153
      %s156 = sadd.s32 %s155, 1
      %p159 = scmp.eq.s32.totalorder %s20, 1
      %p160 = scmp.ne.s32.totalorder %s155, %s157
      %p161 = scmp.eq.s32.totalorder %s20, 0
      %p162 = por %p160, %p161
      %p163 = scmp.ne.s32.totalorder %s155, %s157
      %p164 = scmp.eq.s32.totalorder %s25, 1
      %p165 = por %p163, %p164
      %p166 = scmp.ne.s32.totalorder %s157, %s158
      %p167 = scmp.eq.s32.totalorder %s25, 0
      %p168 = por %p166, %p167
      %p169 = scmp.ne.s32.totalorder %s157, %s158
      %p170 = scmp.eq.s32.totalorder %s26, 1
      %p171 = por %p169, %p170
      %p173 = scmp.ne.s32.totalorder %s158, %s172
      %p174 = scmp.eq.s32.totalorder %s26, 0
      %p175 = por %p173, %p174
      %s176 = ssub.s32 %s27, %s39
      %s177 = ssub.s32 %s28, %s35
      %s178 = sor.u32 %s176, %s177
      %p179 = scmp.eq.s32.totalorder %s178, 0
      %s181 = sadd.s32 %s180, 1
      %s182 = scalar_select %p179, %s180, %s181
      %p185 = pneg %p179
      %p186 = scmp.eq.s32.totalorder %s20, 1
      %p187 = por %p185, %p186
      %p188 = scmp.ne.s32.totalorder %s180, %s183
      %p189 = scmp.eq.s32.totalorder %s20, 0
      %p190 = por %p188, %p189
      %p191 = scmp.ne.s32.totalorder %s180, %s183
      %p192 = scmp.eq.s32.totalorder %s25, 1
      %p193 = por %p191, %p192
      %p194 = scmp.ne.s32.totalorder %s183, %s184
      %p195 = scmp.eq.s32.totalorder %s25, 0
      %p196 = por %p194, %p195
      %p197 = scmp.ne.s32.totalorder %s183, %s184
      %p198 = scmp.eq.s32.totalorder %s26, 1
      %p199 = por %p197, %p198
      %p201 = scmp.ne.s32.totalorder %s184, %s200
      %p202 = scmp.eq.s32.totalorder %s26, 0
      %p203 = por %p201, %p202
      %p204 = scmp.le.s32.totalorder 1, %s20
      %p205 = scmp.lt.s32.totalorder %s20, 3
      %p206 = pnand %p204, %p205
      %p207 = pneg %p206
      // Predicated region
      $region9: #{tpu_custom_call.1} parent=5 // pred_check
        _
      $region10: #{tpu_custom_call.1} parent=5 // pred_check_branch
        %209 = sbr.rel (%p206) target = $region12
      $region11: #{tpu_custom_call.1} parent=5 // pred_region
        %s210 = ssub.s32 %s20, 1
        // Predicated region
        $region13: #{tpu_custom_call.1} parent=11 // pred_check
          %p211 = pneg %p79
        $region14: #{tpu_custom_call.1} parent=11 // pred_check_branch
          %213 = sbr.rel (%p211) target = $region16
        $region15: #{tpu_custom_call.1} parent=11 // pred_region
          %s215 = ssub.s32 128, 128
          %216 = vsyncadd [#allocation6], %s215
          %s218 = sshll.u32 [#allocation5], 4
          %s219 = int_to_ptr.vmem [resolvable:$true] %s218
          %221 = dma.hbm_to_vmem [thread:$0]  %s1, 128, %s219, [#allocation6]
        $region16: #{tpu_custom_call.1} parent=11 // pred_fallthru
          _
        // Predicated region
        $region17: #{tpu_custom_call.1} parent=11 // pred_check
          %p222 = pneg %p100
        $region18: #{tpu_custom_call.1} parent=11 // pred_check_branch
          %224 = sbr.rel (%p222) target = $region20
        $region19: #{tpu_custom_call.1} parent=11 // pred_region
          %s226 = ssub.s32 128, 128
          %227 = vsyncadd [#allocation6], %s226
          %s229 = sshll.u32 [#allocation7], 4
          %s230 = int_to_ptr.vmem [resolvable:$true] %s229
          %232 = dma.hbm_to_vmem [thread:$0]  %s2, 128, %s230, [#allocation6]
        $region20: #{tpu_custom_call.1} parent=11 // pred_fallthru
          _
        // Predicated region
        $region21: #{tpu_custom_call.1} parent=11 // pred_check
          %p233 = pneg %p147
        $region22: #{tpu_custom_call.1} parent=11 // pred_check_branch
          %235 = sbr.rel (%p233) target = $region24
        $region23: #{tpu_custom_call.1} parent=11 // pred_region
          %s237 = ssub.s32 1024, 1024
          %238 = vsyncadd [#allocation9], %s237
          %s239 = sshll.u32 [#allocation8], 4
          %s240 = int_to_ptr.vmem [resolvable:$true] %s239
          %245 = dma.hbm_to_vmem [thread:$0]  %s4, 1024, %s240, [#allocation9], 64, 64, 4
        $region24: #{tpu_custom_call.1} parent=11 // pred_fallthru
          _
        // Predicated region
        $region25: #{tpu_custom_call.1} parent=11 // pred_check
          %p246 = pneg %p168
        $region26: #{tpu_custom_call.1} parent=11 // pred_check_branch
          %248 = sbr.rel (%p246) target = $region28
        $region27: #{tpu_custom_call.1} parent=11 // pred_region
          _
        $region28: #{tpu_custom_call.1} parent=11 // pred_fallthru
          _
      $region12: #{tpu_custom_call.1} parent=5 // pred_fallthru
        _
      %p249 = scmp.lt.s32.totalorder %s20, 2
      // Predicated region
      $region29: #{tpu_custom_call.1} parent=5 // pred_check
        %p250 = pneg %p249
      $region30: #{tpu_custom_call.1} parent=5 // pred_check_branch
        %252 = sbr.rel (%p250) target = $region32
      $region31: #{tpu_custom_call.1} parent=5 // pred_region
        // Predicated region
        $region33: #{tpu_custom_call.1} parent=31 // pred_check
          %p253 = pneg %p52
        $region34: #{tpu_custom_call.1} parent=31 // pred_check_branch
          %255 = sbr.rel (%p253) target = $region36
        $region35: #{tpu_custom_call.1} parent=31 // pred_region
          %s256 = sand.u32 %s42, 1
          %s257 = scalar_lea.sflag [#allocation3], %s256
          %s258 = sand.u32 %s42, 1
          %s259 = smul.addr %s258, 12
          %s260 = scalar_lea.vmem [#allocation2], %s259
          %s262 = ssub.s32 192, 192
          %263 = vsyncadd %s257, %s262
          %s264 = smul.addr %s27, 3
          %s265 = smul.addr %s264, 64
          %s266 = scalar_lea.hbm %s0, %s265
          %s268 = sshll.u32 %s260, 4
          %s269 = int_to_ptr.vmem [resolvable:$true] %s268
          %271 = dma.hbm_to_vmem [thread:$0]  %s266, 192, %s269, %s257
        $region36: #{tpu_custom_call.1} parent=31 // pred_fallthru
          _
        // Predicated region
        $region37: #{tpu_custom_call.1} parent=31 // pred_check
          %p272 = pneg %p120
        $region38: #{tpu_custom_call.1} parent=31 // pred_check_branch
          %274 = sbr.rel (%p272) target = $region40
        $region39: #{tpu_custom_call.1} parent=31 // pred_region
          %p275 = scmp.lt.s32.totalorder %s27, 1
          %s276 = scalar_select %p275, %s27, 1
          %s277 = scalar_lea.vmem %s3, %s276
        $region40: #{tpu_custom_call.1} parent=31 // pred_fallthru
          _
      $region32: #{tpu_custom_call.1} parent=5 // pred_fallthru
        _
      %p278 = scmp.le.s32.totalorder 1, %s20
      %p279 = scmp.lt.s32.totalorder %s20, 3
      %p280 = pnand %p278, %p279
      %p281 = pneg %p280
      // Predicated region
      $region41: #{tpu_custom_call.1} parent=5 // pred_check
        _
      $region42: #{tpu_custom_call.1} parent=5 // pred_check_branch
        %283 = sbr.rel (%p280) target = $region44
      $region43: #{tpu_custom_call.1} parent=5 // pred_region
        %s284 = ssub.s32 %s20, 1
        %s285 = sand.u32 %s45, 1
        %s286 = scalar_lea.sflag [#allocation3], %s285
        %s287 = sand.u32 %s45, 1
        %s288 = smul.addr %s287, 12
        %s289 = scalar_lea.vmem [#allocation2], %s288
        // Predicated region
        $region45: #{tpu_custom_call.1} parent=43 // pred_check
          %p290 = pneg %p58
        $region46: #{tpu_custom_call.1} parent=43 // pred_check_branch
          %292 = sbr.rel (%p290) target = $region48
        $region47: #{tpu_custom_call.1} parent=43 // pred_region
          %293 = dma.done %s286, 192
        $region48: #{tpu_custom_call.1} parent=43 // pred_fallthru
          _
        // Predicated region
        $region49: #{tpu_custom_call.1} parent=43 // pred_check
          %p294 = pneg %p79
        $region50: #{tpu_custom_call.1} parent=43 // pred_check_branch
          %296 = sbr.rel (%p294) target = $region52
        $region51: #{tpu_custom_call.1} parent=43 // pred_region
          %297 = dma.done [#allocation6], 128
        $region52: #{tpu_custom_call.1} parent=43 // pred_fallthru
          _
        // Predicated region
        $region53: #{tpu_custom_call.1} parent=43 // pred_check
          %p298 = pneg %p100
        $region54: #{tpu_custom_call.1} parent=43 // pred_check_branch
          %300 = sbr.rel (%p298) target = $region56
        $region55: #{tpu_custom_call.1} parent=43 // pred_region
          %301 = dma.done [#allocation6], 128
        $region56: #{tpu_custom_call.1} parent=43 // pred_fallthru
          _
        // Predicated region
        $region57: #{tpu_custom_call.1} parent=43 // pred_check
          %p302 = pneg %p147
        $region58: #{tpu_custom_call.1} parent=43 // pred_check_branch
          %304 = sbr.rel (%p302) target = $region60
        $region59: #{tpu_custom_call.1} parent=43 // pred_region
          %305 = dma.done [#allocation9], 1024
        $region60: #{tpu_custom_call.1} parent=43 // pred_fallthru
          _
        %s306 = sand.u32 %s45, 1
        %s307 = scalar_lea.sflag [#allocation3], %s306
        %s308 = sand.u32 %s45, 1
        %s309 = smul.addr %s308, 12
        %s310 = scalar_lea.vmem [#allocation2], %s309
        %p311 = pneg %p58
        %p312 = pneg %p55
        %p313 = pneg %p79
        %p314 = pneg %p76
        %p315 = pneg %p100
        %p316 = pneg %p97
        %p317 = scmp.lt.s32.totalorder %s29, 1
        %s318 = scalar_select %p317, %s29, 1
        %s319 = scalar_lea.vmem %s3, %s318
        %p320 = pneg %p126
        %p321 = pneg %p123
        %p322 = pneg %p147
        %p323 = pneg %p144
        %p324 = pneg %p168
        %p325 = pneg %p165
        %p326 = pneg %p196
        %p327 = pneg %p193
        %s328 = sand.u32 %s183, 1
        %s329 = scalar_lea.sflag [#allocation4], %s328
        %s330 = sand.u32 %s183, 1
        %s331 = smul.addr %s330, 8
        %s332 = scalar_lea.vmem [#allocation10], %s331
        %p333 = scmp.lt.s32.totalorder %s29, 1
        %s334 = scalar_select %p333, %s29, 1
        %s335 = scalar_lea.vmem %s3, %s334
        %v337 = vld [vmem:[%s289] sm:$0xff]
        %v338 = vld [vmem:[%s289 + $0x8] sm:$0xf]
        %v339 = vld [vmem:[#allocation5] sm:$0xff]
        %v340 = vld [vmem:[#allocation7] sm:$0xff]
        %v341 = vunpack.c.l.bf16 %v337
        %v343 = vrot.slane %v337, 4
        %v345 = vunpack.c.l.bf16 %v343
        %v346 = vld [vmem:[%s335] sm:$0x1]
        %v348 = vlaneseq
        %v349 = vshrl.u32 %v348, 7
        %v350 = vsub.s32 0, %v349
        %v351 = vrot.slane %v346, %v350
        %v353 = vmul.f32 %v341, %v339
        %355 = vrot.lane.b32.xlu0 %v340, 16
        %v356 = vpop.permute.xlu0 %355
        %v358 = vmul.f32 %v341, %v356
        %360 = vrot.lane.b32.xlu0 %v358, 112
        %v361 = vpop.permute.xlu0 %360
        %v363 = vsub.f32 %v353, %v361
        %365 = vrot.lane.b32.xlu0 %v339, 16
        %v366 = vpop.permute.xlu0 %365
        %v368 = vmul.f32 %v341, %v366
        %v369 = vmul.f32 %v341, %v340
        %371 = vrot.lane.b32.xlu0 %v369, 16
        %v372 = vpop.permute.xlu0 %371
        %v374 = vadd.f32 %v368, %v372
        %vm375 = vcmask 130048
        %v376 = vsel %vm375, %v363, %v374
        %v377 = vmul.f32 %v376, 0.17677669
        %v378 = vpack.c.bf16 %v377, %v377
        %v379 = vmul.f32 %v345, %v339
        %v380 = vmul.f32 %v345, %v356
        %382 = vrot.lane.b32.xlu0 %v380, 112
        %v383 = vpop.permute.xlu0 %382
        %v385 = vsub.f32 %v379, %v383
        %v386 = vmul.f32 %v345, %v366
        %v387 = vmul.f32 %v345, %v340
        %389 = vrot.lane.b32.xlu0 %v387, 16
        %v390 = vpop.permute.xlu0 %389
        %v392 = vadd.f32 %v386, %v390
        %v393 = vsel %vm375, %v385, %v392
        %v394 = vpack.c.bf16 %v393, %v393
        %vm395 = vcmask 261120
        %v397 = vsel %vm395, %v378, 0
        %v400 = vsel %vm395, %v394, 0
        %402 = vmatprep.subr.bf16.mxu0 0
        %403 = vmatpush1.bf16.xpose.msra.mxu0 %v400
        %404 = vmatprep.subr.bf16.mxu0 0
        %405 = vmatpush1.bf16.xpose.msra.mxu0 0
        %406 = vmatprep.subr.bf16.mxu0 0
        %407 = vmatpush1.bf16.xpose.msra.mxu0 0
        %408 = vmatprep.subr.bf16.mxu0 0
        %409 = vmatpush1.bf16.xpose.msra.mxu0 0
        %410 = vmatprep.subr.bf16.mxu0 0
        %411 = vmatpush1.bf16.xpose.msra.mxu0 0
        %412 = vmatprep.subr.bf16.mxu0 0
        %413 = vmatpush1.bf16.xpose.msra.mxu0 0
        %414 = vmatprep.subr.bf16.mxu0 0
        %415 = vmatpush1.bf16.xpose.msra.mxu0 0
        %416 = vmatprep.subr.bf16.mxu0 0
        %417 = vmatpush1.bf16.xpose.msra.mxu0 0
        %418 = vmatprep.subr.bf16.mxu0 0
        %419 = vmatpush1.bf16.xpose.msra.mxu0 0
        %420 = vmatprep.subr.bf16.mxu0 0
        %421 = vmatpush1.bf16.xpose.msra.mxu0 0
        %422 = vmatprep.subr.bf16.mxu0 0
        %423 = vmatpush1.bf16.xpose.msra.mxu0 0
        %424 = vmatprep.subr.bf16.mxu0 0
        %425 = vmatpush1.bf16.xpose.msra.mxu0 0
        %426 = vmatprep.subr.bf16.mxu0 0
        %427 = vmatpush1.bf16.xpose.msra.mxu0 0
        %428 = vmatprep.subr.bf16.mxu0 0
        %429 = vmatpush1.bf16.xpose.msra.mxu0 0
        %430 = vmatprep.subr.bf16.mxu0 0
        %431 = vmatpush1.bf16.xpose.msra.mxu0 0
        %432 = vmatprep.subr.bf16.mxu0 0
        %433 = vmatpush1.bf16.xpose.msra.mxu0 0
        %434 = vmatprep.mubr.bf16.mxu0 0
        %435 = vmatmul.mubr.bf16.gmra.mrb[0].mxu0 %v397
        %v436 = vpop.f32.mrb[0].mxu0
        %v437 = vadd.f32 %v351, %v436
        %v438 = vpop.f32.mrb[0].mxu0
        %v439 = vpop.f32.mrb[0].mxu0
        %v440 = vpop.f32.mrb[0].mxu0
        %441 = vdwg.mxu0
        %vm442 = vcmask 64512
        %v443 = vsel %vm442, %v437, -inf
        %444 = vmax.xlane.f32.xlu0 %v443
        %v445 = vpop.xlane.xlu0 %444
        %v446 = vsub.f32 %v437, %v445
        %v447 = vmul.f32 %v446, 1.442695
        %v448 = vpow.pop %v447
        %v449 = vsel %vm442, %v448, 0.0
        %450 = vadd.xlane.f32.xlu0 %v449
        %v451 = vpop.xlane.xlu0 %450
        %v452 = vpack.c.bf16 %v448, %v448
        %v454 = vsel %vm442, %v452, 0
        %vm456 = vcmask 1043456
        %v458 = vsel %vm456, %v338, 0
        %460 = vmatprep.subr.bf16.mxu0 0
        %461 = vmatpush1.bf16.msra.mxu0 %v458
        %462 = vmatprep.subr.bf16.mxu0 0
        %463 = vmatpush1.bf16.msra.mxu0 0
        %464 = vmatprep.subr.bf16.mxu0 0
        %465 = vmatpush1.bf16.msra.mxu0 0
        %466 = vmatprep.subr.bf16.mxu0 0
        %467 = vmatpush1.bf16.msra.mxu0 0
        %468 = vmatprep.subr.bf16.mxu0 0
        %469 = vmatpush1.bf16.msra.mxu0 0
        %470 = vmatprep.subr.bf16.mxu0 0
        %471 = vmatpush1.bf16.msra.mxu0 0
        %472 = vmatprep.subr.bf16.mxu0 0
        %473 = vmatpush1.bf16.msra.mxu0 0
        %474 = vmatprep.subr.bf16.mxu0 0
        %475 = vmatpush1.bf16.msra.mxu0 0
        %476 = vmatprep.subr.bf16.mxu0 0
        %477 = vmatpush1.bf16.msra.mxu0 0
        %478 = vmatprep.subr.bf16.mxu0 0
        %479 = vmatpush1.bf16.msra.mxu0 0
        %480 = vmatprep.subr.bf16.mxu0 0
        %481 = vmatpush1.bf16.msra.mxu0 0
        %482 = vmatprep.subr.bf16.mxu0 0
        %483 = vmatpush1.bf16.msra.mxu0 0
        %484 = vmatprep.subr.bf16.mxu0 0
        %485 = vmatpush1.bf16.msra.mxu0 0
        %486 = vmatprep.subr.bf16.mxu0 0
        %487 = vmatpush1.bf16.msra.mxu0 0
        %488 = vmatprep.subr.bf16.mxu0 0
        %489 = vmatpush1.bf16.msra.mxu0 0
        %490 = vmatprep.subr.bf16.mxu0 0
        %491 = vmatpush1.bf16.msra.mxu0 0
        %492 = vmatprep.mubr.bf16.mxu0 0
        %493 = vmatmul.mubr.bf16.gmra.mrb[0].mxu0 %v454
        %v494 = vpop.f32.mrb[0].mxu0
        %v495 = vadd.f32 0.0, %v494
        %v496 = vpop.f32.mrb[0].mxu0
        %v497 = vpop.f32.mrb[0].mxu0
        %v498 = vpop.f32.mrb[0].mxu0
        %499 = vdwg.mxu0
        %v500 = vrcp.pop %v451
        %v501 = vmul.f32 %v495, %v500
        %502 = vrot.lane.b32.xlu0 %v339, 32
        %v503 = vpop.permute.xlu0 %502
        %v505 = vmul.f32 %v341, %v503
        %506 = vrot.lane.b32.xlu0 %v340, 48
        %v507 = vpop.permute.xlu0 %506
        %v509 = vmul.f32 %v341, %v507
        %511 = vrot.lane.b32.xlu0 %v509, 112
        %v512 = vpop.permute.xlu0 %511
        %v514 = vsub.f32 %v505, %v512
        %515 = vrot.lane.b32.xlu0 %v339, 48
        %v516 = vpop.permute.xlu0 %515
        %v518 = vmul.f32 %v341, %v516
        %519 = vrot.lane.b32.xlu0 %v340, 32
        %v520 = vpop.permute.xlu0 %519
        %v522 = vmul.f32 %v341, %v520
        %524 = vrot.lane.b32.xlu0 %v522, 16
        %v525 = vpop.permute.xlu0 %524
        %v527 = vadd.f32 %v518, %v525
        %529 = vrot.lane.b32.xlu0 %v514, 96
        %v530 = vpop.permute.xlu0 %529
        %533 = vrot.lane.b32.xlu0 %v527, 96
        %v534 = vpop.permute.xlu0 %533
        %v536 = vsel %vm375, %v530, %v534
        %v537 = vmul.f32 %v536, 0.17677669
        %v538 = vpack.c.bf16 %v537, %v537
        %v539 = vmul.f32 %v345, %v503
        %v540 = vmul.f32 %v345, %v507
        %542 = vrot.lane.b32.xlu0 %v540, 112
        %v543 = vpop.permute.xlu0 %542
        %v545 = vsub.f32 %v539, %v543
        %v546 = vmul.f32 %v345, %v516
        %v547 = vmul.f32 %v345, %v520
        %549 = vrot.lane.b32.xlu0 %v547, 16
        %v550 = vpop.permute.xlu0 %549
        %v552 = vadd.f32 %v546, %v550
        %554 = vrot.lane.b32.xlu0 %v545, 96
        %v555 = vpop.permute.xlu0 %554
        %558 = vrot.lane.b32.xlu0 %v552, 96
        %v559 = vpop.permute.xlu0 %558
        %v561 = vsel %vm375, %v555, %v559
        %v562 = vpack.c.bf16 %v561, %v561
        %v564 = vsel %vm395, %v538, 0
        %v567 = vsel %vm395, %v562, 0
        %569 = vmatprep.subr.bf16.mxu0 0
        %570 = vmatpush1.bf16.xpose.msra.mxu0 %v567
        %571 = vmatprep.subr.bf16.mxu0 0
        %572 = vmatpush1.bf16.xpose.msra.mxu0 0
        %573 = vmatprep.subr.bf16.mxu0 0
        %574 = vmatpush1.bf16.xpose.msra.mxu0 0
        %575 = vmatprep.subr.bf16.mxu0 0
        %576 = vmatpush1.bf16.xpose.msra.mxu0 0
        %577 = vmatprep.subr.bf16.mxu0 0
        %578 = vmatpush1.bf16.xpose.msra.mxu0 0
        %579 = vmatprep.subr.bf16.mxu0 0
        %580 = vmatpush1.bf16.xpose.msra.mxu0 0
        %581 = vmatprep.subr.bf16.mxu0 0
        %582 = vmatpush1.bf16.xpose.msra.mxu0 0
        %583 = vmatprep.subr.bf16.mxu0 0
        %584 = vmatpush1.bf16.xpose.msra.mxu0 0
        %585 = vmatprep.subr.bf16.mxu0 0
        %586 = vmatpush1.bf16.xpose.msra.mxu0 0
        %587 = vmatprep.subr.bf16.mxu0 0
        %588 = vmatpush1.bf16.xpose.msra.mxu0 0
        %589 = vmatprep.subr.bf16.mxu0 0
        %590 = vmatpush1.bf16.xpose.msra.mxu0 0
        %591 = vmatprep.subr.bf16.mxu0 0
        %592 = vmatpush1.bf16.xpose.msra.mxu0 0
        %593 = vmatprep.subr.bf16.mxu0 0
        %594 = vmatpush1.bf16.xpose.msra.mxu0 0
        %595 = vmatprep.subr.bf16.mxu0 0
        %596 = vmatpush1.bf16.xpose.msra.mxu0 0
        %597 = vmatprep.subr.bf16.mxu0 0
        %598 = vmatpush1.bf16.xpose.msra.mxu0 0
        %599 = vmatprep.subr.bf16.mxu0 0
        %600 = vmatpush1.bf16.xpose.msra.mxu0 0
        %601 = vmatprep.mubr.bf16.mxu0 0
        %602 = vmatmul.mubr.bf16.gmra.mrb[0].mxu0 %v564
        %v603 = vpop.f32.mrb[0].mxu0
        %v604 = vadd.f32 %v351, %v603
        %v605 = vpop.f32.mrb[0].mxu0
        %v606 = vpop.f32.mrb[0].mxu0
        %v607 = vpop.f32.mrb[0].mxu0
        %608 = vdwg.mxu0
        %v609 = vsel %vm442, %v604, -inf
        %610 = vmax.xlane.f32.xlu0 %v609
        %v611 = vpop.xlane.xlu0 %610
        %v612 = vsub.f32 %v604, %v611
        %v613 = vmul.f32 %v612, 1.442695
        %v614 = vpow.pop %v613
        %v615 = vsel %vm442, %v614, 0.0
        %616 = vadd.xlane.f32.xlu0 %v615
        %v617 = vpop.xlane.xlu0 %616
        %v618 = vpack.c.bf16 %v614, %v614
        %v620 = vunpack.c.l.b16 %v338
        %v621 = vpack.c.b16 %v620, %v620
        %622 = vrot.lane.b32.xlu0 %v621, 96
        %v623 = vpop.permute.xlu0 %622
        %v625 = vsel %vm442, %v618, 0
        %v628 = vsel %vm456, %v623, 0
        %630 = vmatprep.subr.bf16.mxu0 0
        %631 = vmatpush1.bf16.msra.mxu0 %v628
        %632 = vmatprep.subr.bf16.mxu0 0
        %633 = vmatpush1.bf16.msra.mxu0 0
        %634 = vmatprep.subr.bf16.mxu0 0
        %635 = vmatpush1.bf16.msra.mxu0 0
        %636 = vmatprep.subr.bf16.mxu0 0
        %637 = vmatpush1.bf16.msra.mxu0 0
        %638 = vmatprep.subr.bf16.mxu0 0
        %639 = vmatpush1.bf16.msra.mxu0 0
        %640 = vmatprep.subr.bf16.mxu0 0
        %641 = vmatpush1.bf16.msra.mxu0 0
        %642 = vmatprep.subr.bf16.mxu0 0
        %643 = vmatpush1.bf16.msra.mxu0 0
        %644 = vmatprep.subr.bf16.mxu0 0
        %645 = vmatpush1.bf16.msra.mxu0 0
        %646 = vmatprep.subr.bf16.mxu0 0
        %647 = vmatpush1.bf16.msra.mxu0 0
        %648 = vmatprep.subr.bf16.mxu0 0
        %649 = vmatpush1.bf16.msra.mxu0 0
        %650 = vmatprep.subr.bf16.mxu0 0
        %651 = vmatpush1.bf16.msra.mxu0 0
        %652 = vmatprep.subr.bf16.mxu0 0
        %653 = vmatpush1.bf16.msra.mxu0 0
        %654 = vmatprep.subr.bf16.mxu0 0
        %655 = vmatpush1.bf16.msra.mxu0 0
        %656 = vmatprep.subr.bf16.mxu0 0
        %657 = vmatpush1.bf16.msra.mxu0 0
        %658 = vmatprep.subr.bf16.mxu0 0
        %659 = vmatpush1.bf16.msra.mxu0 0
        %660 = vmatprep.subr.bf16.mxu0 0
        %661 = vmatpush1.bf16.msra.mxu0 0
        %662 = vmatprep.mubr.bf16.mxu0 0
        %663 = vmatmul.mubr.bf16.gmra.mrb[0].mxu0 %v625
        %v664 = vpop.f32.mrb[0].mxu0
        %v665 = vadd.f32 0.0, %v664
        %v666 = vpop.f32.mrb[0].mxu0
        %v667 = vpop.f32.mrb[0].mxu0
        %v668 = vpop.f32.mrb[0].mxu0
        %669 = vdwg.mxu0
        %v670 = vrcp.pop %v617
        %v671 = vmul.f32 %v665, %v670
        %672 = vrot.lane.b32.xlu0 %v339, 64
        %v673 = vpop.permute.xlu0 %672
        %v675 = vmul.f32 %v341, %v673
        %676 = vrot.lane.b32.xlu0 %v340, 80
        %v677 = vpop.permute.xlu0 %676
        %v679 = vmul.f32 %v341, %v677
        %681 = vrot.lane.b32.xlu0 %v679, 112
        %v682 = vpop.permute.xlu0 %681
        %v684 = vsub.f32 %v675, %v682
        %685 = vrot.lane.b32.xlu0 %v339, 80
        %v686 = vpop.permute.xlu0 %685
        %v688 = vmul.f32 %v341, %v686
        %689 = vrot.lane.b32.xlu0 %v340, 64
        %v690 = vpop.permute.xlu0 %689
        %v692 = vmul.f32 %v341, %v690
        %694 = vrot.lane.b32.xlu0 %v692, 16
        %v695 = vpop.permute.xlu0 %694
        %v697 = vadd.f32 %v688, %v695
        %699 = vrot.lane.b32.xlu0 %v684, 64
        %v700 = vpop.permute.xlu0 %699
        %703 = vrot.lane.b32.xlu0 %v697, 64
        %v704 = vpop.permute.xlu0 %703
        %v706 = vsel %vm375, %v700, %v704
        %v707 = vmul.f32 %v706, 0.17677669
        %v708 = vpack.c.bf16 %v707, %v707
        %v709 = vmul.f32 %v345, %v673
        %v710 = vmul.f32 %v345, %v677
        %712 = vrot.lane.b32.xlu0 %v710, 112
        %v713 = vpop.permute.xlu0 %712
        %v715 = vsub.f32 %v709, %v713
        %v716 = vmul.f32 %v345, %v686
        %v717 = vmul.f32 %v345, %v690
        %719 = vrot.lane.b32.xlu0 %v717, 16
        %v720 = vpop.permute.xlu0 %719
        %v722 = vadd.f32 %v716, %v720
        %724 = vrot.lane.b32.xlu0 %v715, 64
        %v725 = vpop.permute.xlu0 %724
        %728 = vrot.lane.b32.xlu0 %v722, 64
        %v729 = vpop.permute.xlu0 %728
        %v731 = vsel %vm375, %v725, %v729
        %v732 = vpack.c.bf16 %v731, %v731
        %v734 = vsel %vm395, %v708, 0
        %v737 = vsel %vm395, %v732, 0
        %739 = vmatprep.subr.bf16.mxu0 0
        %740 = vmatpush1.bf16.xpose.msra.mxu0 %v737
        %741 = vmatprep.subr.bf16.mxu0 0
        %742 = vmatpush1.bf16.xpose.msra.mxu0 0
        %743 = vmatprep.subr.bf16.mxu0 0
        %744 = vmatpush1.bf16.xpose.msra.mxu0 0
        %745 = vmatprep.subr.bf16.mxu0 0
        %746 = vmatpush1.bf16.xpose.msra.mxu0 0
        %747 = vmatprep.subr.bf16.mxu0 0
        %748 = vmatpush1.bf16.xpose.msra.mxu0 0
        %749 = vmatprep.subr.bf16.mxu0 0
        %750 = vmatpush1.bf16.xpose.msra.mxu0 0
        %751 = vmatprep.subr.bf16.mxu0 0
        %752 = vmatpush1.bf16.xpose.msra.mxu0 0
        %753 = vmatprep.subr.bf16.mxu0 0
        %754 = vmatpush1.bf16.xpose.msra.mxu0 0
        %755 = vmatprep.subr.bf16.mxu0 0
        %756 = vmatpush1.bf16.xpose.msra.mxu0 0
        %757 = vmatprep.subr.bf16.mxu0 0
        %758 = vmatpush1.bf16.xpose.msra.mxu0 0
        %759 = vmatprep.subr.bf16.mxu0 0
        %760 = vmatpush1.bf16.xpose.msra.mxu0 0
        %761 = vmatprep.subr.bf16.mxu0 0
        %762 = vmatpush1.bf16.xpose.msra.mxu0 0
        %763 = vmatprep.subr.bf16.mxu0 0
        %764 = vmatpush1.bf16.xpose.msra.mxu0 0
        %765 = vmatprep.subr.bf16.mxu0 0
        %766 = vmatpush1.bf16.xpose.msra.mxu0 0
        %767 = vmatprep.subr.bf16.mxu0 0
        %768 = vmatpush1.bf16.xpose.msra.mxu0 0
        %769 = vmatprep.subr.bf16.mxu0 0
        %770 = vmatpush1.bf16.xpose.msra.mxu0 0
        %771 = vmatprep.mubr.bf16.mxu0 0
        %772 = vmatmul.mubr.bf16.gmra.mrb[0].mxu0 %v734
        %v773 = vpop.f32.mrb[0].mxu0
        %v774 = vadd.f32 %v351, %v773
        %v775 = vpop.f32.mrb[0].mxu0
        %v776 = vpop.f32.mrb[0].mxu0
        %v777 = vpop.f32.mrb[0].mxu0
        %778 = vdwg.mxu0
        %v779 = vsel %vm442, %v774, -inf
        %780 = vmax.xlane.f32.xlu0 %v779
        %v781 = vpop.xlane.xlu0 %780
        %v782 = vsub.f32 %v774, %v781
        %v783 = vmul.f32 %v782, 1.442695
        %v784 = vpow.pop %v783
        %v785 = vsel %vm442, %v784, 0.0
        %786 = vadd.xlane.f32.xlu0 %v785
        %v787 = vpop.xlane.xlu0 %786
        %v788 = vpack.c.bf16 %v784, %v784
        %789 = vrot.lane.b32.xlu0 %v621, 64
        %v790 = vpop.permute.xlu0 %789
        %v792 = vsel %vm442, %v788, 0
        %v795 = vsel %vm456, %v790, 0
        %797 = vmatprep.subr.bf16.mxu0 0
        %798 = vmatpush1.bf16.msra.mxu0 %v795
        %799 = vmatprep.subr.bf16.mxu0 0
        %800 = vmatpush1.bf16.msra.mxu0 0
        %801 = vmatprep.subr.bf16.mxu0 0
        %802 = vmatpush1.bf16.msra.mxu0 0
        %803 = vmatprep.subr.bf16.mxu0 0
        %804 = vmatpush1.bf16.msra.mxu0 0
        %805 = vmatprep.subr.bf16.mxu0 0
        %806 = vmatpush1.bf16.msra.mxu0 0
        %807 = vmatprep.subr.bf16.mxu0 0
        %808 = vmatpush1.bf16.msra.mxu0 0
        %809 = vmatprep.subr.bf16.mxu0 0
        %810 = vmatpush1.bf16.msra.mxu0 0
        %811 = vmatprep.subr.bf16.mxu0 0
        %812 = vmatpush1.bf16.msra.mxu0 0
        %813 = vmatprep.subr.bf16.mxu0 0
        %814 = vmatpush1.bf16.msra.mxu0 0
        %815 = vmatprep.subr.bf16.mxu0 0
        %816 = vmatpush1.bf16.msra.mxu0 0
        %817 = vmatprep.subr.bf16.mxu0 0
        %818 = vmatpush1.bf16.msra.mxu0 0
        %819 = vmatprep.subr.bf16.mxu0 0
        %820 = vmatpush1.bf16.msra.mxu0 0
        %821 = vmatprep.subr.bf16.mxu0 0
        %822 = vmatpush1.bf16.msra.mxu0 0
        %823 = vmatprep.subr.bf16.mxu0 0
        %824 = vmatpush1.bf16.msra.mxu0 0
        %825 = vmatprep.subr.bf16.mxu0 0
        %826 = vmatpush1.bf16.msra.mxu0 0
        %827 = vmatprep.subr.bf16.mxu0 0
        %828 = vmatpush1.bf16.msra.mxu0 0
        %829 = vmatprep.mubr.bf16.mxu0 0
        %830 = vmatmul.mubr.bf16.gmra.mrb[0].mxu0 %v792
        %v831 = vpop.f32.mrb[0].mxu0
        %v832 = vadd.f32 0.0, %v831
        %v833 = vpop.f32.mrb[0].mxu0
        %v834 = vpop.f32.mrb[0].mxu0
        %v835 = vpop.f32.mrb[0].mxu0
        %836 = vdwg.mxu0
        %v837 = vrcp.pop %v787
        %v838 = vmul.f32 %v832, %v837
        %839 = vrot.lane.b32.xlu0 %v339, 96
        %v840 = vpop.permute.xlu0 %839
        %v842 = vmul.f32 %v341, %v840
        %843 = vrot.lane.b32.xlu0 %v340, 112
        %v844 = vpop.permute.xlu0 %843
        %v846 = vmul.f32 %v341, %v844
        %848 = vrot.lane.b32.xlu0 %v846, 112
        %v849 = vpop.permute.xlu0 %848
        %v851 = vsub.f32 %v842, %v849
        %852 = vrot.lane.b32.xlu0 %v339, 112
        %v853 = vpop.permute.xlu0 %852
        %v855 = vmul.f32 %v341, %v853
        %856 = vrot.lane.b32.xlu0 %v340, 96
        %v857 = vpop.permute.xlu0 %856
        %v859 = vmul.f32 %v341, %v857
        %861 = vrot.lane.b32.xlu0 %v859, 16
        %v862 = vpop.permute.xlu0 %861
        %v864 = vadd.f32 %v855, %v862
        %866 = vrot.lane.b32.xlu0 %v851, 32
        %v867 = vpop.permute.xlu0 %866
        %870 = vrot.lane.b32.xlu0 %v864, 32
        %v871 = vpop.permute.xlu0 %870
        %v873 = vsel %vm375, %v867, %v871
        %v874 = vmul.f32 %v873, 0.17677669
        %v875 = vpack.c.bf16 %v874, %v874
        %v876 = vmul.f32 %v345, %v840
        %v877 = vmul.f32 %v345, %v844
        %879 = vrot.lane.b32.xlu0 %v877, 112
        %v880 = vpop.permute.xlu0 %879
        %v882 = vsub.f32 %v876, %v880
        %v883 = vmul.f32 %v345, %v853
        %v884 = vmul.f32 %v345, %v857
        %886 = vrot.lane.b32.xlu0 %v884, 16
        %v887 = vpop.permute.xlu0 %886
        %v889 = vadd.f32 %v883, %v887
        %891 = vrot.lane.b32.xlu0 %v882, 32
        %v892 = vpop.permute.xlu0 %891
        %895 = vrot.lane.b32.xlu0 %v889, 32
        %v896 = vpop.permute.xlu0 %895
        %v898 = vsel %vm375, %v892, %v896
        %v899 = vpack.c.bf16 %v898, %v898
        %v901 = vsel %vm395, %v875, 0
        %v904 = vsel %vm395, %v899, 0
        %906 = vmatprep.subr.bf16.mxu0 0
        %907 = vmatpush1.bf16.xpose.msra.mxu0 %v904
        %908 = vmatprep.subr.bf16.mxu0 0
        %909 = vmatpush1.bf16.xpose.msra.mxu0 0
        %910 = vmatprep.subr.bf16.mxu0 0
        %911 = vmatpush1.bf16.xpose.msra.mxu0 0
        %912 = vmatprep.subr.bf16.mxu0 0
        %913 = vmatpush1.bf16.xpose.msra.mxu0 0
        %914 = vmatprep.subr.bf16.mxu0 0
        %915 = vmatpush1.bf16.xpose.msra.mxu0 0
        %916 = vmatprep.subr.bf16.mxu0 0
        %917 = vmatpush1.bf16.xpose.msra.mxu0 0
        %918 = vmatprep.subr.bf16.mxu0 0
        %919 = vmatpush1.bf16.xpose.msra.mxu0 0
        %920 = vmatprep.subr.bf16.mxu0 0
        %921 = vmatpush1.bf16.xpose.msra.mxu0 0
        %922 = vmatprep.subr.bf16.mxu0 0
        %923 = vmatpush1.bf16.xpose.msra.mxu0 0
        %924 = vmatprep.subr.bf16.mxu0 0
        %925 = vmatpush1.bf16.xpose.msra.mxu0 0
        %926 = vmatprep.subr.bf16.mxu0 0
        %927 = vmatpush1.bf16.xpose.msra.mxu0 0
        %928 = vmatprep.subr.bf16.mxu0 0
        %929 = vmatpush1.bf16.xpose.msra.mxu0 0
        %930 = vmatprep.subr.bf16.mxu0 0
        %931 = vmatpush1.bf16.xpose.msra.mxu0 0
        %932 = vmatprep.subr.bf16.mxu0 0
        %933 = vmatpush1.bf16.xpose.msra.mxu0 0
        %934 = vmatprep.subr.bf16.mxu0 0
        %935 = vmatpush1.bf16.xpose.msra.mxu0 0
        %936 = vmatprep.subr.bf16.mxu0 0
        %937 = vmatpush1.bf16.xpose.msra.mxu0 0
        %938 = vmatprep.mubr.bf16.mxu0 0
        %939 = vmatmul.mubr.bf16.gmra.mrb[0].mxu0 %v901
        %v940 = vpop.f32.mrb[0].mxu0
        %v941 = vadd.f32 %v351, %v940
        %v942 = vpop.f32.mrb[0].mxu0
        %v943 = vpop.f32.mrb[0].mxu0
        %v944 = vpop.f32.mrb[0].mxu0
        %945 = vdwg.mxu0
        %v946 = vsel %vm442, %v941, -inf
        %947 = vmax.xlane.f32.xlu0 %v946
        %v948 = vpop.xlane.xlu0 %947
        %v949 = vsub.f32 %v941, %v948
        %v950 = vmul.f32 %v949, 1.442695
        %v951 = vpow.pop %v950
        %v952 = vsel %vm442, %v951, 0.0
        %953 = vadd.xlane.f32.xlu0 %v952
        %v954 = vpop.xlane.xlu0 %953
        %v955 = vpack.c.bf16 %v951, %v951
        %956 = vrot.lane.b32.xlu0 %v621, 32
        %v957 = vpop.permute.xlu0 %956
        %v959 = vsel %vm442, %v955, 0
        %v962 = vsel %vm456, %v957, 0
        %964 = vmatprep.subr.bf16.mxu0 0
        %965 = vmatpush1.bf16.msra.mxu0 %v962
        %966 = vmatprep.subr.bf16.mxu0 0
        %967 = vmatpush1.bf16.msra.mxu0 0
        %968 = vmatprep.subr.bf16.mxu0 0
        %969 = vmatpush1.bf16.msra.mxu0 0
        %970 = vmatprep.subr.bf16.mxu0 0
        %971 = vmatpush1.bf16.msra.mxu0 0
        %972 = vmatprep.subr.bf16.mxu0 0
        %973 = vmatpush1.bf16.msra.mxu0 0
        %974 = vmatprep.subr.bf16.mxu0 0
        %975 = vmatpush1.bf16.msra.mxu0 0
        %976 = vmatprep.subr.bf16.mxu0 0
        %977 = vmatpush1.bf16.msra.mxu0 0
        %978 = vmatprep.subr.bf16.mxu0 0
        %979 = vmatpush1.bf16.msra.mxu0 0
        %980 = vmatprep.subr.bf16.mxu0 0
        %981 = vmatpush1.bf16.msra.mxu0 0
        %982 = vmatprep.subr.bf16.mxu0 0
        %983 = vmatpush1.bf16.msra.mxu0 0
        %984 = vmatprep.subr.bf16.mxu0 0
        %985 = vmatpush1.bf16.msra.mxu0 0
        %986 = vmatprep.subr.bf16.mxu0 0
        %987 = vmatpush1.bf16.msra.mxu0 0
        %988 = vmatprep.subr.bf16.mxu0 0
        %989 = vmatpush1.bf16.msra.mxu0 0
        %990 = vmatprep.subr.bf16.mxu0 0
        %991 = vmatpush1.bf16.msra.mxu0 0
        %992 = vmatprep.subr.bf16.mxu0 0
        %993 = vmatpush1.bf16.msra.mxu0 0
        %994 = vmatprep.subr.bf16.mxu0 0
        %995 = vmatpush1.bf16.msra.mxu0 0
        %996 = vmatprep.mubr.bf16.mxu0 0
        %997 = vmatmul.mubr.bf16.gmra.mrb[0].mxu0 %v959
        %v998 = vpop.f32.mrb[0].mxu0
        %v999 = vadd.f32 0.0, %v998
        %v1000 = vpop.f32.mrb[0].mxu0
        %v1001 = vpop.f32.mrb[0].mxu0
        %v1002 = vpop.f32.mrb[0].mxu0
        %1003 = vdwg.mxu0
        %v1004 = vrcp.pop %v954
        %v1005 = vmul.f32 %v999, %v1004
        %1007 = vrot.lane.b32.xlu0 %v671, 32
        %v1008 = vpop.permute.xlu0 %1007
        %1011 = vrot.lane.b32.xlu0 %v838, 64
        %v1012 = vpop.permute.xlu0 %1011
        %1015 = vrot.lane.b32.xlu0 %v1005, 96
        %v1016 = vpop.permute.xlu0 %1015
        %v1018 = vsel %vm395, %v501, %v1008
        %vm1019 = vcmask 523264
        %v1020 = vsel %vm1019, %v1018, %v1012
        %vm1021 = vcmask 785408
        %v1022 = vsel %vm1021, %v1020, %v1016
        %v1023 = vpack.c.bf16 %v1022, %v1022
        %v1024 = vld [vmem:[#allocation8] sm:$0xf]
        %v1025 = vld [vmem:[#allocation8 + $0x4] sm:$0xf]
        %v1026 = vld [vmem:[#allocation8 + $0x8] sm:$0xf]
        %v1027 = vld [vmem:[#allocation8 + $0xc] sm:$0xf]
        %v1028 = vld [vmem:[#allocation8 + $0x10] sm:$0xf]
        %v1029 = vld [vmem:[#allocation8 + $0x14] sm:$0xf]
        %v1030 = vld [vmem:[#allocation8 + $0x18] sm:$0xf]
        %v1031 = vld [vmem:[#allocation8 + $0x1c] sm:$0xf]
        %v1032 = vld [vmem:[#allocation8 + $0x20] sm:$0xf]
        %v1033 = vld [vmem:[#allocation8 + $0x24] sm:$0xf]
        %v1034 = vld [vmem:[#allocation8 + $0x28] sm:$0xf]
        %v1035 = vld [vmem:[#allocation8 + $0x2c] sm:$0xf]
        %v1036 = vld [vmem:[#allocation8 + $0x30] sm:$0xf]
        %v1037 = vld [vmem:[#allocation8 + $0x34] sm:$0xf]
        %v1038 = vld [vmem:[#allocation8 + $0x38] sm:$0xf]
        %v1039 = vld [vmem:[#allocation8 + $0x3c] sm:$0xf]
        %v1040 = vld [vmem:[%s5] sm:$0x1]
        %v1042 = vlaneseq
        %v1043 = vshrl.u32 %v1042, 7
        %v1044 = vsub.s32 0, %v1043
        %v1045 = vrot.slane %v1040, %v1044
        %v1063 = vunpack.c.l.b16 %v1024
        %v1064 = vunpack.c.l.b16 %v1025
        %v1065 = vunpack.c.l.b16 %v1026
        %v1066 = vunpack.c.l.b16 %v1027
        %v1067 = vunpack.c.l.b16 %v1028
        %v1068 = vunpack.c.l.b16 %v1029
        %v1069 = vunpack.c.l.b16 %v1030
        %v1070 = vunpack.c.l.b16 %v1031
        %v1071 = vunpack.c.l.b16 %v1032
        %v1072 = vunpack.c.l.b16 %v1033
        %v1073 = vunpack.c.l.b16 %v1034
        %v1074 = vunpack.c.l.b16 %v1035
        %v1075 = vunpack.c.l.b16 %v1036
        %v1076 = vunpack.c.l.b16 %v1037
        %v1077 = vunpack.c.l.b16 %v1038
        %v1078 = vunpack.c.l.b16 %v1039
        %v1079 = vpack.c.b16 %v1064, %v1063
        %v1080 = vpack.c.b16 %v1066, %v1065
        %v1081 = vpack.c.b16 %v1068, %v1067
        %v1082 = vpack.c.b16 %v1070, %v1069
        %v1083 = vpack.c.b16 %v1072, %v1071
        %v1084 = vpack.c.b16 %v1074, %v1073
        %v1085 = vpack.c.b16 %v1076, %v1075
        %v1086 = vpack.c.b16 %v1078, %v1077
        %1095 = vmatprep.subr.bf16.mxu0 0
        %1096 = vmatpush1.bf16.msra.mxu0 %v1079
        %1097 = vmatprep.subr.bf16.mxu0 0
        %1098 = vmatpush1.bf16.msra.mxu0 %v1080
        %1099 = vmatprep.subr.bf16.mxu0 0
        %1100 = vmatpush1.bf16.msra.mxu0 %v1081
        %1101 = vmatprep.subr.bf16.mxu0 0
        %1102 = vmatpush1.bf16.msra.mxu0 %v1082
        %1103 = vmatprep.subr.bf16.mxu0 0
        %1104 = vmatpush1.bf16.msra.mxu0 %v1083
        %1105 = vmatprep.subr.bf16.mxu0 0
        %1106 = vmatpush1.bf16.msra.mxu0 %v1084
        %1107 = vmatprep.subr.bf16.mxu0 0
        %1108 = vmatpush1.bf16.msra.mxu0 %v1085
        %1109 = vmatprep.subr.bf16.mxu0 0
        %1110 = vmatpush1.bf16.msra.mxu0 %v1086
        %1111 = vmatprep.subr.bf16.mxu0 0
        %1112 = vmatpush1.bf16.msra.mxu0 0
        %1113 = vmatprep.subr.bf16.mxu0 0
        %1114 = vmatpush1.bf16.msra.mxu0 0
        %1115 = vmatprep.subr.bf16.mxu0 0
        %1116 = vmatpush1.bf16.msra.mxu0 0
        %1117 = vmatprep.subr.bf16.mxu0 0
        %1118 = vmatpush1.bf16.msra.mxu0 0
        %1119 = vmatprep.subr.bf16.mxu0 0
        %1120 = vmatpush1.bf16.msra.mxu0 0
        %1121 = vmatprep.subr.bf16.mxu0 0
        %1122 = vmatpush1.bf16.msra.mxu0 0
        %1123 = vmatprep.subr.bf16.mxu0 0
        %1124 = vmatpush1.bf16.msra.mxu0 0
        %1125 = vmatprep.subr.bf16.mxu0 0
        %1126 = vmatpush1.bf16.msra.mxu0 0
        %1127 = vmatprep.mubr.bf16.mxu0 0
        %1128 = vmatmul.mubr.bf16.gmra.mrb[0].mxu0 %v1023
        %v1129 = vpop.f32.mrb[0].mxu0
        %v1130 = vadd.f32 %v1045, %v1129
        %v1131 = vpop.f32.mrb[0].mxu0
        %v1132 = vpop.f32.mrb[0].mxu0
        %v1133 = vpop.f32.mrb[0].mxu0
        %1134 = vdwg.mxu0
        %1135 = vst [vmem:[%s332] sm:$0xff] %v1130
        %s1136 = sand.u32 %s183, 1
        %s1137 = scalar_lea.sflag [#allocation4], %s1136
        %s1138 = sand.u32 %s183, 1
        %s1139 = smul.addr %s1138, 8
        %s1140 = scalar_lea.vmem [#allocation10], %s1139
        // Predicated region
        $region61: #{tpu_custom_call.1} parent=43 // pred_check
          %p1141 = pneg %p193
        $region62: #{tpu_custom_call.1} parent=43 // pred_check_branch
          %1143 = sbr.rel (%p1141) target = $region64
        $region63: #{tpu_custom_call.1} parent=43 // pred_region
          %s1145 = ssub.s32 128, 128
          %1146 = vsyncadd %s1137, %s1145
          %s1147 = sadd.s32 %s30, %s29
          %s1148 = smul.addr %s1147, 128
          %s1149 = scalar_lea.hbm %s6, %s1148
          %s1151 = sshll.u32 %s1140, 4
          %s1152 = int_to_ptr.vmem [resolvable:$true] %s1151
          %1154 = dma.vmem_to_hbm [thread:$0]  %s1152, 128, %s1149, %s1137
        $region64: #{tpu_custom_call.1} parent=43 // pred_fallthru
          _
      $region44: #{tpu_custom_call.1} parent=5 // pred_fallthru
        _
      %p1155 = scmp.le.s32.totalorder 2, %s20
      // Predicated region
      $region65: #{tpu_custom_call.1} parent=5 // pred_check
        %p1156 = pneg %p1155
      $region66: #{tpu_custom_call.1} parent=5 // pred_check_branch
        %1158 = sbr.rel (%p1156) target = $region68
      $region67: #{tpu_custom_call.1} parent=5 // pred_region
        %s1159 = ssub.s32 %s20, 2
        // Predicated region
        $region69: #{tpu_custom_call.1} parent=67 // pred_check
          %p1160 = pneg %p199
        $region70: #{tpu_custom_call.1} parent=67 // pred_check_branch
          %1162 = sbr.rel (%p1160) target = $region72
        $region71: #{tpu_custom_call.1} parent=67 // pred_region
          %s1163 = sand.u32 %s184, 1
          %s1164 = scalar_lea.sflag [#allocation4], %s1163
          %s1165 = sand.u32 %s184, 1
          %s1166 = smul.addr %s1165, 8
          %s1167 = scalar_lea.vmem [#allocation10], %s1166
          %1168 = dma.done %s1164, 128
        $region72: #{tpu_custom_call.1} parent=67 // pred_fallthru
          _
      $region68: #{tpu_custom_call.1} parent=5 // pred_fallthru
        _
    $region6: #{tpu_custom_call.1} parent=1 // loop_footer
      %s24 = sadd.s32 1, %s20
    $region7: #{tpu_custom_call.1} parent=1 // loop_footer_branch
      %19 = sbr.rel target = $region3
    $region8: #{tpu_custom_call.1} parent=1 // loop_exit
      _
    %1169 = vsyncpa [#allocation3], 1
    %s1170 = scalar_lea.sflag [#allocation3], 1
    %1171 = vsyncpa %s1170, 1
    %1172 = vsyncpa [#allocation6], 1
    %1173 = vsyncpa [#allocation9], 1
    %1174 = vsyncpa [#allocation4], 1
    %s1175 = scalar_lea.sflag [#allocation4], 1
    %1176 = vsyncpa %s1175, 1

// kernel: tpu_custom_call.1
$region0: #{tpu_custom_call.1}
  #allocation0 [shape = 'u32[]', space=smem, size = 0x4, offset = 0x4, fixed_abs, tag = 'smem constant byte address 0x4 - core index']
  #allocation1 [shape = 'u32[144,128]{1,0:T(1,128)}', space=vmem, size = 0x12000, scoped, tag = 'internal scratch']
  %s0 = inlined_call_operand.hbm [shape: bf16[2,8,384], index: 0, kind: input, shape index: {}]
  %s1 = inlined_call_operand.hbm [shape: f32[8,16], index: 1, kind: input, shape index: {}]
  %s2 = inlined_call_operand.hbm [shape: f32[8,16], index: 2, kind: input, shape index: {}]
  %s3 = inlined_call_operand.vmem [shape: f32[2,1,8], index: 3, kind: input, shape index: {}]
  %s4 = inlined_call_operand.hbm [shape: bf16[128,128], index: 4, kind: input, shape index: {}]
  %s5 = inlined_call_operand.vmem [shape: f32[1,128], index: 5, kind: input, shape index: {}]
  %s6 = inlined_call_operand.hbm [shape: f32[2,8,128], index: 6, kind: output, shape index: {}]
  %s7 = sld [smem:[#allocation0]]
  $region73: #{tpu_custom_call.1} parent=0
    _
  %s9 = ssub.s32 1, %s7
  %s10 = scalar_select 0, %s9, %s7
  $region1: #{tpu_custom_call.1} parent=0
    #allocation2 [shape = 'u8[12288]{0}', space=vmem, size = 0x3000, scoped, tag = 'input window, operand 0']
    #allocation3 [shape = 's32[2]{0}', space=sflag, size = 0x8, scoped, tag = 'scoped memory for tpu_custom_call.1']
    #allocation4 [shape = 's32[2]{0}', space=sflag, size = 0x8, scoped, tag = 'scoped memory for tpu_custom_call.1']
    #allocation5 [shape = 'u8[4096]{0}', space=vmem, size = 0x1000, scoped, tag = 'input window, operand 1, single buffered']
    #allocation6 [shape = 's32[1]{0}', space=sflag, size = 0x4, scoped, tag = 'scoped memory for tpu_custom_call.1']
    #allocation7 [shape = 'u8[4096]{0}', space=vmem, size = 0x1000, scoped, tag = 'input window, operand 2, single buffered']
    #allocation8 [shape = 'u8[32768]{0}', space=vmem, size = 0x8000, scoped, tag = 'input window, operand 4, single buffered']
    #allocation9 [shape = 's32[1]{0}', space=sflag, size = 0x4, scoped, tag = 'scoped memory for tpu_custom_call.1']
    #allocation10 [shape = 'u8[8192]{0}', space=vmem, size = 0x2000, scoped, tag = 'output window, operand 0']
    %11 = vsyncpa [#allocation3], 0
    %s12 = scalar_lea.sflag [#allocation3], 1
    %13 = vsyncpa %s12, 0
    %14 = vsyncpa [#allocation6], 0
    %15 = vsyncpa [#allocation9], 0
    %16 = vsyncpa [#allocation4], 0
    %s17 = scalar_lea.sflag [#allocation4], 1
    %18 = vsyncpa %s17, 0
    loop: start=0, step=1, limit=4
    $region2: #{tpu_custom_call.1} parent=1 // loop_pre_header
      _
    $region3: #{tpu_custom_call.1} parent=1 // loop_header
      %s20 = sphi 0, %s24
      %p21 = scmp.ge.s32.totalorder %s20, 4
      %s27 = sphi 0, %s39
      %s28 = sphi 0, %s35
      %s29 = sphi 0, %s27
      %s30 = sphi 0, %s28
      %s31 = sphi 0, %s29
      %s32 = sphi 0, %s30
      %s42 = sphi 0, %s44
      %s45 = sphi 0, %s42
      %s46 = sphi 0, %s45
      %s62 = sphi 0, %s46
      %s66 = sphi 0, %s66
      %s68 = sphi 0, %s66
      %s69 = sphi 0, %s68
      %s83 = sphi 0, %s69
      %s87 = sphi 0, %s87
      %s89 = sphi 0, %s87
      %s90 = sphi 0, %s89
      %s104 = sphi 0, %s90
      %s110 = sphi 0, %s112
      %s113 = sphi 0, %s110
      %s114 = sphi 0, %s113
      %s130 = sphi 0, %s114
      %s134 = sphi 0, %s134
      %s136 = sphi 0, %s134
      %s137 = sphi 0, %s136
      %s151 = sphi 0, %s137
      %s155 = sphi 0, %s155
      %s157 = sphi 0, %s155
      %s158 = sphi 0, %s157
      %s172 = sphi 0, %s158
      %s180 = sphi 0, %s182
      %s183 = sphi 0, %s180
      %s184 = sphi 0, %s183
      %s200 = sphi 0, %s184
    $region4: #{tpu_custom_call.1} parent=1 // loop_header_branch
      %23 = sbr.rel (%p21) target = $region8
    $region5: #{tpu_custom_call.1} parent=1 // loop_body
      %s25 = ssub.s32 %s20, 1
      %s26 = ssub.s32 %s20, 2
      %s33 = sadd.s32 1, %s28
      %p34 = scmp.ge.s32.totalorder %s33, 1
      %s35 = scalar_select %p34, 0, %s33
      %s36 = sadd.s32 1, %s27
      %s37 = scalar_select %p34, %s36, %s27
      %p38 = scmp.ge.s32.totalorder %s37, 2
      %s39 = scalar_select %p38, 0, %s37
      %s40 = ssub.s32 %s27, %s39
      %p41 = scmp.eq.s32.totalorder %s40, 0
      %s43 = sadd.s32 %s42, 1
      %s44 = scalar_select %p41, %s42, %s43
      %p47 = pneg %p41
      %p48 = scmp.eq.s32.totalorder %s20, 1
      %p49 = por %p47, %p48
      %p50 = scmp.ne.s32.totalorder %s42, %s45
      %p51 = scmp.eq.s32.totalorder %s20, 0
      %p52 = por %p50, %p51
      %p53 = scmp.ne.s32.totalorder %s42, %s45
      %p54 = scmp.eq.s32.totalorder %s25, 1
      %p55 = por %p53, %p54
      %p56 = scmp.ne.s32.totalorder %s45, %s46
      %p57 = scmp.eq.s32.totalorder %s25, 0
      %p58 = por %p56, %p57
      %p59 = scmp.ne.s32.totalorder %s45, %s46
      %p60 = scmp.eq.s32.totalorder %s26, 1
      %p61 = por %p59, %p60
      %p63 = scmp.ne.s32.totalorder %s46, %s62
      %p64 = scmp.eq.s32.totalorder %s26, 0
      %p65 = por %p63, %p64
      %s67 = sadd.s32 %s66, 1
      %p70 = scmp.eq.s32.totalorder %s20, 1
      %p71 = scmp.ne.s32.totalorder %s66, %s68
      %p72 = scmp.eq.s32.totalorder %s20, 0
      %p73 = por %p71, %p72
      %p74 = scmp.ne.s32.totalorder %s66, %s68
      %p75 = scmp.eq.s32.totalorder %s25, 1
      %p76 = por %p74, %p75
      %p77 = scmp.ne.s32.totalorder %s68, %s69
      %p78 = scmp.eq.s32.totalorder %s25, 0
      %p79 = por %p77, %p78
      %p80 = scmp.ne.s32.totalorder %s68, %s69
      %p81 = scmp.eq.s32.totalorder %s26, 1
      %p82 = por %p80, %p81
      %p84 = scmp.ne.s32.totalorder %s69, %s83
      %p85 = scmp.eq.s32.totalorder %s26, 0
      %p86 = por %p84, %p85
      %s88 = sadd.s32 %s87, 1
      %p91 = scmp.eq.s32.totalorder %s20, 1
      %p92 = scmp.ne.s32.totalorder %s87, %s89
      %p93 = scmp.eq.s32.totalorder %s20, 0
      %p94 = por %p92, %p93
      %p95 = scmp.ne.s32.totalorder %s87, %s89
      %p96 = scmp.eq.s32.totalorder %s25, 1
      %p97 = por %p95, %p96
      %p98 = scmp.ne.s32.totalorder %s89, %s90
      %p99 = scmp.eq.s32.totalorder %s25, 0
      %p100 = por %p98, %p99
      %p101 = scmp.ne.s32.totalorder %s89, %s90
      %p102 = scmp.eq.s32.totalorder %s26, 1
      %p103 = por %p101, %p102
      %p105 = scmp.ne.s32.totalorder %s90, %s104
      %p106 = scmp.eq.s32.totalorder %s26, 0
      %p107 = por %p105, %p106
      %s108 = ssub.s32 %s27, %s39
      %p109 = scmp.eq.s32.totalorder %s108, 0
      %s111 = sadd.s32 %s110, 1
      %s112 = scalar_select %p109, %s110, %s111
      %p115 = pneg %p109
      %p116 = scmp.eq.s32.totalorder %s20, 1
      %p117 = por %p115, %p116
      %p118 = scmp.ne.s32.totalorder %s110, %s113
      %p119 = scmp.eq.s32.totalorder %s20, 0
      %p120 = por %p118, %p119
      %p121 = scmp.ne.s32.totalorder %s110, %s113
      %p122 = scmp.eq.s32.totalorder %s25, 1
      %p123 = por %p121, %p122
      %p124 = scmp.ne.s32.totalorder %s113, %s114
      %p125 = scmp.eq.s32.totalorder %s25, 0
      %p126 = por %p124, %p125
      %p127 = scmp.ne.s32.totalorder %s113, %s114
      %p128 = scmp.eq.s32.totalorder %s26, 1
      %p129 = por %p127, %p128
      %p131 = scmp.ne.s32.totalorder %s114, %s130
      %p132 = scmp.eq.s32.totalorder %s26, 0
      %p133 = por %p131, %p132
      %s135 = sadd.s32 %s134, 1
      %p138 = scmp.eq.s32.totalorder %s20, 1
      %p139 = scmp.ne.s32.totalorder %s134, %s136
      %p140 = scmp.eq.s32.totalorder %s20, 0
      %p141 = por %p139, %p140
      %p142 = scmp.ne.s32.totalorder %s134, %s136
      %p143 = scmp.eq.s32.totalorder %s25, 1
      %p144 = por %p142, %p143
      %p145 = scmp.ne.s32.totalorder %s136, %s137
      %p146 = scmp.eq.s32.totalorder %s25, 0
      %p147 = por %p145, %p146
      %p148 = scmp.ne.s32.totalorder %s136, %s137
      %p149 = scmp.eq.s32.totalorder %s26, 1
      %p150 = por %p148, %p149
      %p152 = scmp.ne.s32.totalorder %s137, %s151
      %p153 = scmp.eq.s32.totalorder %s26, 0
      %p154 = por %p152, %p153
      %s156 = sadd.s32 %s155, 1
      %p159 = scmp.eq.s32.totalorder %s20, 1
      %p160 = scmp.ne.s32.totalorder %s155, %s157
      %p161 = scmp.eq.s32.totalorder %s20, 0
      %p162 = por %p160, %p161
      %p163 = scmp.ne.s32.totalorder %s155, %s157
      %p164 = scmp.eq.s32.totalorder %s25, 1
      %p165 = por %p163, %p164
      %p166 = scmp.ne.s32.totalorder %s157, %s158
      %p167 = scmp.eq.s32.totalorder %s25, 0
      %p168 = por %p166, %p167
      %p169 = scmp.ne.s32.totalorder %s157, %s158
      %p170 = scmp.eq.s32.totalorder %s26, 1
      %p171 = por %p169, %p170
      %p173 = scmp.ne.s32.totalorder %s158, %s172
      %p174 = scmp.eq.s32.totalorder %s26, 0
      %p175 = por %p173, %p174
      %s176 = ssub.s32 %s27, %s39
      %s177 = ssub.s32 %s28, %s35
      %s178 = sor.u32 %s176, %s177
      %p179 = scmp.eq.s32.totalorder %s178, 0
      %s181 = sadd.s32 %s180, 1
      %s182 = scalar_select %p179, %s180, %s181
      %p185 = pneg %p179
      %p186 = scmp.eq.s32.totalorder %s20, 1
      %p187 = por %p185, %p186
      %p188 = scmp.ne.s32.totalorder %s180, %s183
      %p189 = scmp.eq.s32.totalorder %s20, 0
      %p190 = por %p188, %p189
      %p191 = scmp.ne.s32.totalorder %s180, %s183
      %p192 = scmp.eq.s32.totalorder %s25, 1
      %p193 = por %p191, %p192
      %p194 = scmp.ne.s32.totalorder %s183, %s184
      %p195 = scmp.eq.s32.totalorder %s25, 0
      %p196 = por %p194, %p195
      %p197 = scmp.ne.s32.totalorder %s183, %s184
      %p198 = scmp.eq.s32.totalorder %s26, 1
      %p199 = por %p197, %p198
      %p201 = scmp.ne.s32.totalorder %s184, %s200
      %p202 = scmp.eq.s32.totalorder %s26, 0
      %p203 = por %p201, %p202
      %p204 = scmp.le.s32.totalorder 1, %s20
      %p205 = scmp.lt.s32.totalorder %s20, 3
      %p206 = pnand %p204, %p205
      %p207 = pneg %p206
      // Predicated region
      $region9: #{tpu_custom_call.1} parent=5 // pred_check
        _
      $region10: #{tpu_custom_call.1} parent=5 // pred_check_branch
        %209 = sbr.rel (%p206) target = $region12
      $region11: #{tpu_custom_call.1} parent=5 // pred_region
        %s210 = ssub.s32 %s20, 1
        // Predicated region
        $region13: #{tpu_custom_call.1} parent=11 // pred_check
          %p211 = pneg %p79
        $region14: #{tpu_custom_call.1} parent=11 // pred_check_branch
          %213 = sbr.rel (%p211) target = $region16
        $region15: #{tpu_custom_call.1} parent=11 // pred_region
          %s215 = ssub.s32 128, 128
          %216 = vsyncadd [#allocation6], %s215
          %s218 = sshll.u32 [#allocation5], 4
          %s219 = int_to_ptr.vmem [resolvable:$true] %s218
          %221 = dma.hbm_to_vmem [thread:$0]  %s1, 128, %s219, [#allocation6]
        $region16: #{tpu_custom_call.1} parent=11 // pred_fallthru
          _
        // Predicated region
        $region17: #{tpu_custom_call.1} parent=11 // pred_check
          %p222 = pneg %p100
        $region18: #{tpu_custom_call.1} parent=11 // pred_check_branch
          %224 = sbr.rel (%p222) target = $region20
        $region19: #{tpu_custom_call.1} parent=11 // pred_region
          %s226 = ssub.s32 128, 128
          %227 = vsyncadd [#allocation6], %s226
          %s229 = sshll.u32 [#allocation7], 4
          %s230 = int_to_ptr.vmem [resolvable:$true] %s229
          %232 = dma.hbm_to_vmem [thread:$0]  %s2, 128, %s230, [#allocation6]
        $region20: #{tpu_custom_call.1} parent=11 // pred_fallthru
          _
        // Predicated region
        $region21: #{tpu_custom_call.1} parent=11 // pred_check
          %p233 = pneg %p147
        $region22: #{tpu_custom_call.1} parent=11 // pred_check_branch
          %235 = sbr.rel (%p233) target = $region24
        $region23: #{tpu_custom_call.1} parent=11 // pred_region
          %s237 = ssub.s32 1024, 1024
          %238 = vsyncadd [#allocation9], %s237
          %s239 = sshll.u32 [#allocation8], 4
          %s240 = int_to_ptr.vmem [resolvable:$true] %s239
          %245 = dma.hbm_to_vmem [thread:$0]  %s4, 1024, %s240, [#allocation9], 64, 64, 4
        $region24: #{tpu_custom_call.1} parent=11 // pred_fallthru
          _
        // Predicated region
        $region25: #{tpu_custom_call.1} parent=11 // pred_check
          %p246 = pneg %p168
        $region26: #{tpu_custom_call.1} parent=11 // pred_check_branch
          %248 = sbr.rel (%p246) target = $region28
        $region27: #{tpu_custom_call.1} parent=11 // pred_region
          _
        $region28: #{tpu_custom_call.1} parent=11 // pred_fallthru
          _
      $region12: #{tpu_custom_call.1} parent=5 // pred_fallthru
        _
      %p249 = scmp.lt.s32.totalorder %s20, 2
      // Predicated region
      $region29: #{tpu_custom_call.1} parent=5 // pred_check
        %p250 = pneg %p249
      $region30: #{tpu_custom_call.1} parent=5 // pred_check_branch
        %252 = sbr.rel (%p250) target = $region32
      $region31: #{tpu_custom_call.1} parent=5 // pred_region
        // Predicated region
        $region33: #{tpu_custom_call.1} parent=31 // pred_check
          %p253 = pneg %p52
        $region34: #{tpu_custom_call.1} parent=31 // pred_check_branch
          %255 = sbr.rel (%p253) target = $region36
        $region35: #{tpu_custom_call.1} parent=31 // pred_region
          %s256 = sand.u32 %s42, 1
          %s257 = scalar_lea.sflag [#allocation3], %s256
          %s258 = sand.u32 %s42, 1
          %s259 = smul.addr %s258, 12
          %s260 = scalar_lea.vmem [#allocation2], %s259
          %s262 = ssub.s32 192, 192
          %263 = vsyncadd %s257, %s262
          %s264 = smul.addr %s27, 3
          %s265 = smul.addr %s264, 64
          %s266 = scalar_lea.hbm %s0, %s265
          %s268 = sshll.u32 %s260, 4
          %s269 = int_to_ptr.vmem [resolvable:$true] %s268
          %271 = dma.hbm_to_vmem [thread:$0]  %s266, 192, %s269, %s257
        $region36: #{tpu_custom_call.1} parent=31 // pred_fallthru
          _
        // Predicated region
        $region37: #{tpu_custom_call.1} parent=31 // pred_check
          %p272 = pneg %p120
        $region38: #{tpu_custom_call.1} parent=31 // pred_check_branch
          %274 = sbr.rel (%p272) target = $region40
        $region39: #{tpu_custom_call.1} parent=31 // pred_region
          %p275 = scmp.lt.s32.totalorder %s27, 1
          %s276 = scalar_select %p275, %s27, 1
          %s277 = scalar_lea.vmem %s3, %s276
        $region40: #{tpu_custom_call.1} parent=31 // pred_fallthru
          _
      $region32: #{tpu_custom_call.1} parent=5 // pred_fallthru
        _
      %p278 = scmp.le.s32.totalorder 1, %s20
      %p279 = scmp.lt.s32.totalorder %s20, 3
      %p280 = pnand %p278, %p279
      %p281 = pneg %p280
      // Predicated region
      $region41: #{tpu_custom_call.1} parent=5 // pred_check
        _
      $region42: #{tpu_custom_call.1} parent=5 // pred_check_branch
        %283 = sbr.rel (%p280) target = $region44
      $region43: #{tpu_custom_call.1} parent=5 // pred_region
        %s284 = ssub.s32 %s20, 1
        %s285 = sand.u32 %s45, 1
        %s286 = scalar_lea.sflag [#allocation3], %s285
        %s287 = sand.u32 %s45, 1
        %s288 = smul.addr %s287, 12
        %s289 = scalar_lea.vmem [#allocation2], %s288
        // Predicated region
        $region45: #{tpu_custom_call.1} parent=43 // pred_check
          %p290 = pneg %p58
        $region46: #{tpu_custom_call.1} parent=43 // pred_check_branch
          %292 = sbr.rel (%p290) target = $region48
        $region47: #{tpu_custom_call.1} parent=43 // pred_region
          %293 = dma.done %s286, 192
        $region48: #{tpu_custom_call.1} parent=43 // pred_fallthru
          _
        // Predicated region
        $region49: #{tpu_custom_call.1} parent=43 // pred_check
          %p294 = pneg %p79
        $region50: #{tpu_custom_call.1} parent=43 // pred_check_branch
          %296 = sbr.rel (%p294) target = $region52
        $region51: #{tpu_custom_call.1} parent=43 // pred_region
          %297 = dma.done [#allocation6], 128
        $region52: #{tpu_custom_call.1} parent=43 // pred_fallthru
          _
        // Predicated region
        $region53: #{tpu_custom_call.1} parent=43 // pred_check
          %p298 = pneg %p100
        $region54: #{tpu_custom_call.1} parent=43 // pred_check_branch
          %300 = sbr.rel (%p298) target = $region56
        $region55: #{tpu_custom_call.1} parent=43 // pred_region
          %301 = dma.done [#allocation6], 128
        $region56: #{tpu_custom_call.1} parent=43 // pred_fallthru
          _
        // Predicated region
        $region57: #{tpu_custom_call.1} parent=43 // pred_check
          %p302 = pneg %p147
        $region58: #{tpu_custom_call.1} parent=43 // pred_check_branch
          %304 = sbr.rel (%p302) target = $region60
        $region59: #{tpu_custom_call.1} parent=43 // pred_region
          %305 = dma.done [#allocation9], 1024
        $region60: #{tpu_custom_call.1} parent=43 // pred_fallthru
          _
        %s306 = sand.u32 %s45, 1
        %s307 = scalar_lea.sflag [#allocation3], %s306
        %s308 = sand.u32 %s45, 1
        %s309 = smul.addr %s308, 12
        %s310 = scalar_lea.vmem [#allocation2], %s309
        %p311 = pneg %p58
        %p312 = pneg %p55
        %p313 = pneg %p79
        %p314 = pneg %p76
        %p315 = pneg %p100
        %p316 = pneg %p97
        %p317 = scmp.lt.s32.totalorder %s29, 1
        %s318 = scalar_select %p317, %s29, 1
        %s319 = scalar_lea.vmem %s3, %s318
        %p320 = pneg %p126
        %p321 = pneg %p123
        %p322 = pneg %p147
        %p323 = pneg %p144
        %p324 = pneg %p168
        %p325 = pneg %p165
        %p326 = pneg %p196
        %p327 = pneg %p193
        %s328 = sand.u32 %s183, 1
        %s329 = scalar_lea.sflag [#allocation4], %s328
        %s330 = sand.u32 %s183, 1
        %s331 = smul.addr %s330, 8
        %s332 = scalar_lea.vmem [#allocation10], %s331
        %p333 = scmp.lt.s32.totalorder %s29, 1
        %s334 = scalar_select %p333, %s29, 1
        %s335 = scalar_lea.vmem %s3, %s334
        %v337 = vld [vmem:[%s289] sm:$0xff]
        %v338 = vld [vmem:[%s289 + $0x8] sm:$0xf]
        %v339 = vld [vmem:[#allocation5] sm:$0xff]
        %v340 = vld [vmem:[#allocation7] sm:$0xff]
        %v341 = vunpack.c.l.bf16 %v337
        %v343 = vrot.slane %v337, 4
        %v345 = vunpack.c.l.bf16 %v343
        %v346 = vld [vmem:[%s335] sm:$0x1]
        %v348 = vlaneseq
        %v349 = vshrl.u32 %v348, 7
        %v350 = vsub.s32 0, %v349
        %v351 = vrot.slane %v346, %v350
        %v353 = vmul.f32 %v341, %v339
        %355 = vrot.lane.b32.xlu0 %v340, 16
        %v356 = vpop.permute.xlu0 %355
        %v358 = vmul.f32 %v341, %v356
        %360 = vrot.lane.b32.xlu0 %v358, 112
        %v361 = vpop.permute.xlu0 %360
        %v363 = vsub.f32 %v353, %v361
        %365 = vrot.lane.b32.xlu0 %v339, 16
        %v366 = vpop.permute.xlu0 %365
        %v368 = vmul.f32 %v341, %v366
        %v369 = vmul.f32 %v341, %v340
        %371 = vrot.lane.b32.xlu0 %v369, 16
        %v372 = vpop.permute.xlu0 %371
        %v374 = vadd.f32 %v368, %v372
        %vm375 = vcmask 130048
        %v376 = vsel %vm375, %v363, %v374
        %v377 = vmul.f32 %v376, 0.17677669
        %v378 = vpack.c.bf16 %v377, %v377
        %v379 = vmul.f32 %v345, %v339
        %v380 = vmul.f32 %v345, %v356
        %382 = vrot.lane.b32.xlu0 %v380, 112
        %v383 = vpop.permute.xlu0 %382
        %v385 = vsub.f32 %v379, %v383
        %v386 = vmul.f32 %v345, %v366
        %v387 = vmul.f32 %v345, %v340
        %389 = vrot.lane.b32.xlu0 %v387, 16
        %v390 = vpop.permute.xlu0 %389
        %v392 = vadd.f32 %v386, %v390
        %v393 = vsel %vm375, %v385, %v392
        %v394 = vpack.c.bf16 %v393, %v393
        %vm395 = vcmask 261120
        %v397 = vsel %vm395, %v378, 0
        %v400 = vsel %vm395, %v394, 0
        %402 = vmatprep.subr.bf16.mxu0 0
        %403 = vmatpush1.bf16.xpose.msra.mxu0 %v400
        %404 = vmatprep.subr.bf16.mxu0 0
        %405 = vmatpush1.bf16.xpose.msra.mxu0 0
        %406 = vmatprep.subr.bf16.mxu0 0
        %407 = vmatpush1.bf16.xpose.msra.mxu0 0
        %408 = vmatprep.subr.bf16.mxu0 0
        %409 = vmatpush1.bf16.xpose.msra.mxu0 0
        %410 = vmatprep.subr.bf16.mxu0 0
        %411 = vmatpush1.bf16.xpose.msra.mxu0 0
        %412 = vmatprep.subr.bf16.mxu0 0
        %413 = vmatpush1.bf16.xpose.msra.mxu0 0
        %414 = vmatprep.subr.bf16.mxu0 0
        %415 = vmatpush1.bf16.xpose.msra.mxu0 0
        %416 = vmatprep.subr.bf16.mxu0 0
        %417 = vmatpush1.bf16.xpose.msra.mxu0 0
        %418 = vmatprep.subr.bf16.mxu0 0
        %419 = vmatpush1.bf16.xpose.msra.mxu0 0
        %420 = vmatprep.subr.bf16.mxu0 0
        %421 = vmatpush1.bf16.xpose.msra.mxu0 0
        %422 = vmatprep.subr.bf16.mxu0 0
        %423 = vmatpush1.bf16.xpose.msra.mxu0 0
        %424 = vmatprep.subr.bf16.mxu0 0
        %425 = vmatpush1.bf16.xpose.msra.mxu0 0
        %426 = vmatprep.subr.bf16.mxu0 0
        %427 = vmatpush1.bf16.xpose.msra.mxu0 0
        %428 = vmatprep.subr.bf16.mxu0 0
        %429 = vmatpush1.bf16.xpose.msra.mxu0 0
        %430 = vmatprep.subr.bf16.mxu0 0
        %431 = vmatpush1.bf16.xpose.msra.mxu0 0
        %432 = vmatprep.subr.bf16.mxu0 0
        %433 = vmatpush1.bf16.xpose.msra.mxu0 0
        %434 = vmatprep.mubr.bf16.mxu0 0
        %435 = vmatmul.mubr.bf16.gmra.mrb[0].mxu0 %v397
        %v436 = vpop.f32.mrb[0].mxu0
        %v437 = vadd.f32 %v351, %v436
        %v438 = vpop.f32.mrb[0].mxu0
        %v439 = vpop.f32.mrb[0].mxu0
        %v440 = vpop.f32.mrb[0].mxu0
        %441 = vdwg.mxu0
        %vm442 = vcmask 64512
        %v443 = vsel %vm442, %v437, -inf
        %444 = vmax.xlane.f32.xlu0 %v443
        %v445 = vpop.xlane.xlu0 %444
        %v446 = vsub.f32 %v437, %v445
        %v447 = vmul.f32 %v446, 1.442695
        %v448 = vpow.pop %v447
        %v449 = vsel %vm442, %v448, 0.0
        %450 = vadd.xlane.f32.xlu0 %v449
        %v451 = vpop.xlane.xlu0 %450
        %v452 = vpack.c.bf16 %v448, %v448
        %v454 = vsel %vm442, %v452, 0
        %vm456 = vcmask 1043456
        %v458 = vsel %vm456, %v338, 0
        %460 = vmatprep.subr.bf16.mxu0 0
        %461 = vmatpush1.bf16.msra.mxu0 %v458
        %462 = vmatprep.subr.bf16.mxu0 0
        %463 = vmatpush1.bf16.msra.mxu0 0
        %464 = vmatprep.subr.bf16.mxu0 0
        %465 = vmatpush1.bf16.msra.mxu0 0
        %466 = vmatprep.subr.bf16.mxu0 0
        %467 = vmatpush1.bf16.msra.mxu0 0
        %468 = vmatprep.subr.bf16.mxu0 0
        %469 = vmatpush1.bf16.msra.mxu0 0
        %470 = vmatprep.subr.bf16.mxu0 0
        %471 = vmatpush1.bf16.msra.mxu0 0
        %472 = vmatprep.subr.bf16.mxu0 0
        %473 = vmatpush1.bf16.msra.mxu0 0
        %474 = vmatprep.subr.bf16.mxu0 0
        %475 = vmatpush1.bf16.msra.mxu0 0
        %476 = vmatprep.subr.bf16.mxu0 0
        %477 = vmatpush1.bf16.msra.mxu0 0
        %478 = vmatprep.subr.bf16.mxu0 0
        %479 = vmatpush1.bf16.msra.mxu0 0
        %480 = vmatprep.subr.bf16.mxu0 0
        %481 = vmatpush1.bf16.msra.mxu0 0
        %482 = vmatprep.subr.bf16.mxu0 0
        %483 = vmatpush1.bf16.msra.mxu0 0
        %484 = vmatprep.subr.bf16.mxu0 0
        %485 = vmatpush1.bf16.msra.mxu0 0
        %486 = vmatprep.subr.bf16.mxu0 0
        %487 = vmatpush1.bf16.msra.mxu0 0
        %488 = vmatprep.subr.bf16.mxu0 0
        %489 = vmatpush1.bf16.msra.mxu0 0
        %490 = vmatprep.subr.bf16.mxu0 0
        %491 = vmatpush1.bf16.msra.mxu0 0
        %492 = vmatprep.mubr.bf16.mxu0 0
        %493 = vmatmul.mubr.bf16.gmra.mrb[0].mxu0 %v454
        %v494 = vpop.f32.mrb[0].mxu0
        %v495 = vadd.f32 0.0, %v494
        %v496 = vpop.f32.mrb[0].mxu0
        %v497 = vpop.f32.mrb[0].mxu0
        %v498 = vpop.f32.mrb[0].mxu0
        %499 = vdwg.mxu0
        %v500 = vrcp.pop %v451
        %v501 = vmul.f32 %v495, %v500
        %502 = vrot.lane.b32.xlu0 %v339, 32
        %v503 = vpop.permute.xlu0 %502
        %v505 = vmul.f32 %v341, %v503
        %506 = vrot.lane.b32.xlu0 %v340, 48
        %v507 = vpop.permute.xlu0 %506
        %v509 = vmul.f32 %v341, %v507
        %511 = vrot.lane.b32.xlu0 %v509, 112
        %v512 = vpop.permute.xlu0 %511
        %v514 = vsub.f32 %v505, %v512
        %515 = vrot.lane.b32.xlu0 %v339, 48
        %v516 = vpop.permute.xlu0 %515
        %v518 = vmul.f32 %v341, %v516
        %519 = vrot.lane.b32.xlu0 %v340, 32
        %v520 = vpop.permute.xlu0 %519
        %v522 = vmul.f32 %v341, %v520
        %524 = vrot.lane.b32.xlu0 %v522, 16
        %v525 = vpop.permute.xlu0 %524
        %v527 = vadd.f32 %v518, %v525
        %529 = vrot.lane.b32.xlu0 %v514, 96
        %v530 = vpop.permute.xlu0 %529
        %533 = vrot.lane.b32.xlu0 %v527, 96
        %v534 = vpop.permute.xlu0 %533
        %v536 = vsel %vm375, %v530, %v534
        %v537 = vmul.f32 %v536, 0.17677669
        %v538 = vpack.c.bf16 %v537, %v537
        %v539 = vmul.f32 %v345, %v503
        %v540 = vmul.f32 %v345, %v507
        %542 = vrot.lane.b32.xlu0 %v540, 112
        %v543 = vpop.permute.xlu0 %542
        %v545 = vsub.f32 %v539, %v543
        %v546 = vmul.f32 %v345, %v516
        %v547 = vmul.f32 %v345, %v520
        %549 = vrot.lane.b32.xlu0 %v547, 16
        %v550 = vpop.permute.xlu0 %549
        %v552 = vadd.f32 %v546, %v550
        %554 = vrot.lane.b32.xlu0 %v545, 96
        %v555 = vpop.permute.xlu0 %554
        %558 = vrot.lane.b32.xlu0 %v552, 96
        %v559 = vpop.permute.xlu0 %558
        %v561 = vsel %vm375, %v555, %v559
        %v562 = vpack.c.bf16 %v561, %v561
        %v564 = vsel %vm395, %v538, 0
        %v567 = vsel %vm395, %v562, 0
        %569 = vmatprep.subr.bf16.mxu0 0
        %570 = vmatpush1.bf16.xpose.msra.mxu0 %v567
        %571 = vmatprep.subr.bf16.mxu0 0
        %572 = vmatpush1.bf16.xpose.msra.mxu0 0
        %573 = vmatprep.subr.bf16.mxu0 0
        %574 = vmatpush1.bf16.xpose.msra.mxu0 0
        %575 = vmatprep.subr.bf16.mxu0 0
        %576 = vmatpush1.bf16.xpose.msra.mxu0 0
        %577 = vmatprep.subr.bf16.mxu0 0
        %578 = vmatpush1.bf16.xpose.msra.mxu0 0
        %579 = vmatprep.subr.bf16.mxu0 0
        %580 = vmatpush1.bf16.xpose.msra.mxu0 0
        %581 = vmatprep.subr.bf16.mxu0 0
        %582 = vmatpush1.bf16.xpose.msra.mxu0 0
        %583 = vmatprep.subr.bf16.mxu0 0
        %584 = vmatpush1.bf16.xpose.msra.mxu0 0
        %585 = vmatprep.subr.bf16.mxu0 0
        %586 = vmatpush1.bf16.xpose.msra.mxu0 0
        %587 = vmatprep.subr.bf16.mxu0 0
        %588 = vmatpush1.bf16.xpose.msra.mxu0 0
        %589 = vmatprep.subr.bf16.mxu0 0
        %590 = vmatpush1.bf16.xpose.msra.mxu0 0
        %591 = vmatprep.subr.bf16.mxu0 0
        %592 = vmatpush1.bf16.xpose.msra.mxu0 0
        %593 = vmatprep.subr.bf16.mxu0 0
        %594 = vmatpush1.bf16.xpose.msra.mxu0 0
        %595 = vmatprep.subr.bf16.mxu0 0
        %596 = vmatpush1.bf16.xpose.msra.mxu0 0
        %597 = vmatprep.subr.bf16.mxu0 0
        %598 = vmatpush1.bf16.xpose.msra.mxu0 0
        %599 = vmatprep.subr.bf16.mxu0 0
        %600 = vmatpush1.bf16.xpose.msra.mxu0 0
        %601 = vmatprep.mubr.bf16.mxu0 0
        %602 = vmatmul.mubr.bf16.gmra.mrb[0].mxu0 %v564
        %v603 = vpop.f32.mrb[0].mxu0
        %v604 = vadd.f32 %v351, %v603
        %v605 = vpop.f32.mrb[0].mxu0
        %v606 = vpop.f32.mrb[0].mxu0
        %v607 = vpop.f32.mrb[0].mxu0
        %608 = vdwg.mxu0
        %v609 = vsel %vm442, %v604, -inf
        %610 = vmax.xlane.f32.xlu0 %v609
        %v611 = vpop.xlane.xlu0 %610
        %v612 = vsub.f32 %v604, %v611
        %v613 = vmul.f32 %v612, 1.442695
        %v614 = vpow.pop %v613
        %v615 = vsel %vm442, %v614, 0.0
        %616 = vadd.xlane.f32.xlu0 %v615
        %v617 = vpop.xlane.xlu0 %616
        %v618 = vpack.c.bf16 %v614, %v614
        %v620 = vunpack.c.l.b16 %v338
        %v621 = vpack.c.b16 %v620, %v620
        %622 = vrot.lane.b32.xlu0 %v621, 96
        %v623 = vpop.permute.xlu0 %622
        %v625 = vsel %vm442, %v618, 0
        %v628 = vsel %vm456, %v623, 0
        %630 = vmatprep.subr.bf16.mxu0 0
        %631 = vmatpush1.bf16.msra.mxu0 %v628
        %632 = vmatprep.subr.bf16.mxu0 0
        %633 = vmatpush1.bf16.msra.mxu0 0
        %634 = vmatprep.subr.bf16.mxu0 0
        %635 = vmatpush1.bf16.msra.mxu0 0
        %636 = vmatprep.subr.bf16.mxu0 0
        %637 = vmatpush1.bf16.msra.mxu0 0
        %638 = vmatprep.subr.bf16.mxu0 0
        %639 = vmatpush1.bf16.msra.mxu0 0
        %640 = vmatprep.subr.bf16.mxu0 0
        %641 = vmatpush1.bf16.msra.mxu0 0
        %642 = vmatprep.subr.bf16.mxu0 0
        %643 = vmatpush1.bf16.msra.mxu0 0
        %644 = vmatprep.subr.bf16.mxu0 0
        %645 = vmatpush1.bf16.msra.mxu0 0
        %646 = vmatprep.subr.bf16.mxu0 0
        %647 = vmatpush1.bf16.msra.mxu0 0
        %648 = vmatprep.subr.bf16.mxu0 0
        %649 = vmatpush1.bf16.msra.mxu0 0
        %650 = vmatprep.subr.bf16.mxu0 0
        %651 = vmatpush1.bf16.msra.mxu0 0
        %652 = vmatprep.subr.bf16.mxu0 0
        %653 = vmatpush1.bf16.msra.mxu0 0
        %654 = vmatprep.subr.bf16.mxu0 0
        %655 = vmatpush1.bf16.msra.mxu0 0
        %656 = vmatprep.subr.bf16.mxu0 0
        %657 = vmatpush1.bf16.msra.mxu0 0
        %658 = vmatprep.subr.bf16.mxu0 0
        %659 = vmatpush1.bf16.msra.mxu0 0
        %660 = vmatprep.subr.bf16.mxu0 0
        %661 = vmatpush1.bf16.msra.mxu0 0
        %662 = vmatprep.mubr.bf16.mxu0 0
        %663 = vmatmul.mubr.bf16.gmra.mrb[0].mxu0 %v625
        %v664 = vpop.f32.mrb[0].mxu0
        %v665 = vadd.f32 0.0, %v664
        %v666 = vpop.f32.mrb[0].mxu0
        %v667 = vpop.f32.mrb[0].mxu0
        %v668 = vpop.f32.mrb[0].mxu0
        %669 = vdwg.mxu0
        %v670 = vrcp.pop %v617
        %v671 = vmul.f32 %v665, %v670
        %672 = vrot.lane.b32.xlu0 %v339, 64
        %v673 = vpop.permute.xlu0 %672
        %v675 = vmul.f32 %v341, %v673
        %676 = vrot.lane.b32.xlu0 %v340, 80
        %v677 = vpop.permute.xlu0 %676
        %v679 = vmul.f32 %v341, %v677
        %681 = vrot.lane.b32.xlu0 %v679, 112
        %v682 = vpop.permute.xlu0 %681
        %v684 = vsub.f32 %v675, %v682
        %685 = vrot.lane.b32.xlu0 %v339, 80
        %v686 = vpop.permute.xlu0 %685
        %v688 = vmul.f32 %v341, %v686
        %689 = vrot.lane.b32.xlu0 %v340, 64
        %v690 = vpop.permute.xlu0 %689
        %v692 = vmul.f32 %v341, %v690
        %694 = vrot.lane.b32.xlu0 %v692, 16
        %v695 = vpop.permute.xlu0 %694
        %v697 = vadd.f32 %v688, %v695
        %699 = vrot.lane.b32.xlu0 %v684, 64
        %v700 = vpop.permute.xlu0 %699
        %703 = vrot.lane.b32.xlu0 %v697, 64
        %v704 = vpop.permute.xlu0 %703
        %v706 = vsel %vm375, %v700, %v704
        %v707 = vmul.f32 %v706, 0.17677669
        %v708 = vpack.c.bf16 %v707, %v707
        %v709 = vmul.f32 %v345, %v673
        %v710 = vmul.f32 %v345, %v677
        %712 = vrot.lane.b32.xlu0 %v710, 112
        %v713 = vpop.permute.xlu0 %712
        %v715 = vsub.f32 %v709, %v713
        %v716 = vmul.f32 %v345, %v686
        %v717 = vmul.f32 %v345, %v690
        %719 = vrot.lane.b32.xlu0 %v717, 16
        %v720 = vpop.permute.xlu0 %719
        %v722 = vadd.f32 %v716, %v720
        %724 = vrot.lane.b32.xlu0 %v715, 64
        %v725 = vpop.permute.xlu0 %724
        %728 = vrot.lane.b32.xlu0 %v722, 64
        %v729 = vpop.permute.xlu0 %728
        %v731 = vsel %vm375, %v725, %v729
        %v732 = vpack.c.bf16 %v731, %v731
        %v734 = vsel %vm395, %v708, 0
        %v737 = vsel %vm395, %v732, 0
        %739 = vmatprep.subr.bf16.mxu0 0
        %740 = vmatpush1.bf16.xpose.msra.mxu0 %v737
        %741 = vmatprep.subr.bf16.mxu0 0
        %742 = vmatpush1.bf16.xpose.msra.mxu0 0
        %743 = vmatprep.subr.bf16.mxu0 0
        %744 = vmatpush1.bf16.xpose.msra.mxu0 0
        %745 = vmatprep.subr.bf16.mxu0 0
        %746 = vmatpush1.bf16.xpose.msra.mxu0 0
        %747 = vmatprep.subr.bf16.mxu0 0
        %748 = vmatpush1.bf16.xpose.msra.mxu0 0
        %749 = vmatprep.subr.bf16.mxu0 0
        %750 = vmatpush1.bf16.xpose.msra.mxu0 0
        %751 = vmatprep.subr.bf16.mxu0 0
        %752 = vmatpush1.bf16.xpose.msra.mxu0 0
        %753 = vmatprep.subr.bf16.mxu0 0
        %754 = vmatpush1.bf16.xpose.msra.mxu0 0
        %755 = vmatprep.subr.bf16.mxu0 0
        %756 = vmatpush1.bf16.xpose.msra.mxu0 0
        %757 = vmatprep.subr.bf16.mxu0 0
        %758 = vmatpush1.bf16.xpose.msra.mxu0 0
        %759 = vmatprep.subr.bf16.mxu0 0
        %760 = vmatpush1.bf16.xpose.msra.mxu0 0
        %761 = vmatprep.subr.bf16.mxu0 0
        %762 = vmatpush1.bf16.xpose.msra.mxu0 0
        %763 = vmatprep.subr.bf16.mxu0 0
        %764 = vmatpush1.bf16.xpose.msra.mxu0 0
        %765 = vmatprep.subr.bf16.mxu0 0
        %766 = vmatpush1.bf16.xpose.msra.mxu0 0
        %767 = vmatprep.subr.bf16.mxu0 0
        %768 = vmatpush1.bf16.xpose.msra.mxu0 0
        %769 = vmatprep.subr.bf16.mxu0 0
        %770 = vmatpush1.bf16.xpose.msra.mxu0 0
        %771 = vmatprep.mubr.bf16.mxu0 0
        %772 = vmatmul.mubr.bf16.gmra.mrb[0].mxu0 %v734
        %v773 = vpop.f32.mrb[0].mxu0
        %v774 = vadd.f32 %v351, %v773
        %v775 = vpop.f32.mrb[0].mxu0
        %v776 = vpop.f32.mrb[0].mxu0
        %v777 = vpop.f32.mrb[0].mxu0
        %778 = vdwg.mxu0
        %v779 = vsel %vm442, %v774, -inf
        %780 = vmax.xlane.f32.xlu0 %v779
        %v781 = vpop.xlane.xlu0 %780
        %v782 = vsub.f32 %v774, %v781
        %v783 = vmul.f32 %v782, 1.442695
        %v784 = vpow.pop %v783
        %v785 = vsel %vm442, %v784, 0.0
        %786 = vadd.xlane.f32.xlu0 %v785
        %v787 = vpop.xlane.xlu0 %786
        %v788 = vpack.c.bf16 %v784, %v784
        %789 = vrot.lane.b32.xlu0 %v621, 64
        %v790 = vpop.permute.xlu0 %789
        %v792 = vsel %vm442, %v788, 0
        %v795 = vsel %vm456, %v790, 0
        %797 = vmatprep.subr.bf16.mxu0 0
        %798 = vmatpush1.bf16.msra.mxu0 %v795
        %799 = vmatprep.subr.bf16.mxu0 0
        %800 = vmatpush1.bf16.msra.mxu0 0
        %801 = vmatprep.subr.bf16.mxu0 0
        %802 = vmatpush1.bf16.msra.mxu0 0
        %803 = vmatprep.subr.bf16.mxu0 0
        %804 = vmatpush1.bf16.msra.mxu0 0
        %805 = vmatprep.subr.bf16.mxu0 0
        %806 = vmatpush1.bf16.msra.mxu0 0
        %807 = vmatprep.subr.bf16.mxu0 0
        %808 = vmatpush1.bf16.msra.mxu0 0
        %809 = vmatprep.subr.bf16.mxu0 0
        %810 = vmatpush1.bf16.msra.mxu0 0
        %811 = vmatprep.subr.bf16.mxu0 0
        %812 = vmatpush1.bf16.msra.mxu0 0
        %813 = vmatprep.subr.bf16.mxu0 0
        %814 = vmatpush1.bf16.msra.mxu0 0
        %815 = vmatprep.subr.bf16.mxu0 0
        %816 = vmatpush1.bf16.msra.mxu0 0
        %817 = vmatprep.subr.bf16.mxu0 0
        %818 = vmatpush1.bf16.msra.mxu0 0
        %819 = vmatprep.subr.bf16.mxu0 0
        %820 = vmatpush1.bf16.msra.mxu0 0
        %821 = vmatprep.subr.bf16.mxu0 0
        %822 = vmatpush1.bf16.msra.mxu0 0
        %823 = vmatprep.subr.bf16.mxu0 0
        %824 = vmatpush1.bf16.msra.mxu0 0
        %825 = vmatprep.subr.bf16.mxu0 0
        %826 = vmatpush1.bf16.msra.mxu0 0
        %827 = vmatprep.subr.bf16.mxu0 0
        %828 = vmatpush1.bf16.msra.mxu0 0
        %829 = vmatprep.mubr.bf16.mxu0 0
        %830 = vmatmul.mubr.bf16.gmra.mrb[0].mxu0 %v792
        %v831 = vpop.f32.mrb[0].mxu0
        %v832 = vadd.f32 0.0, %v831
        %v833 = vpop.f32.mrb[0].mxu0
        %v834 = vpop.f32.mrb[0].mxu0
        %v835 = vpop.f32.mrb[0].mxu0
        %836 = vdwg.mxu0
        %v837 = vrcp.pop %v787
        %v838 = vmul.f32 %v832, %v837
        %839 = vrot.lane.b32.xlu0 %v339, 96
        %v840 = vpop.permute.xlu0 %839
        %v842 = vmul.f32 %v341, %v840
        %843 = vrot.lane.b32.xlu0 %v340, 112
        %v844 = vpop.permute.xlu0 %843
        %v846 = vmul.f32 %v341, %v844
        %848 = vrot.lane.b32.xlu0 %v846, 112
        %v849 = vpop.permute.xlu0 %848
        %v851 = vsub.f32 %v842, %v849
        %852 = vrot.lane.b32.xlu0 %v339, 112
        %v853 = vpop.permute.xlu0 %852
        %v855 = vmul.f32 %v341, %v853
        %856 = vrot.lane.b32.xlu0 %v340, 96
        %v857 = vpop.permute.xlu0 %856
        %v859 = vmul.f32 %v341, %v857
        %861 = vrot.lane.b32.xlu0 %v859, 16
        %v862 = vpop.permute.xlu0 %861
        %v864 = vadd.f32 %v855, %v862
        %866 = vrot.lane.b32.xlu0 %v851, 32
        %v867 = vpop.permute.xlu0 %866
        %870 = vrot.lane.b32.xlu0 %v864, 32
        %v871 = vpop.permute.xlu0 %870
        %v873 = vsel %vm375, %v867, %v871
        %v874 = vmul.f32 %v873, 0.17677669
        %v875 = vpack.c.bf16 %v874, %v874
        %v876 = vmul.f32 %v345, %v840
        %v877 = vmul.f32 %v345, %v844
        %879 = vrot.lane.b32.xlu0 %v877, 112
        %v880 = vpop.permute.xlu0 %879
        %v882 = vsub.f32 %v876, %v880
        %v883 = vmul.f32 %v345, %v853
        %v884 = vmul.f32 %v345, %v857
        %886 = vrot.lane.b32.xlu0 %v884, 16
        %v887 = vpop.permute.xlu0 %886
        %v889 = vadd.f32 %v883, %v887
        %891 = vrot.lane.b32.xlu0 %v882, 32
        %v892 = vpop.permute.xlu0 %891
        %895 = vrot.lane.b32.xlu0 %v889, 32
        %v896 = vpop.permute.xlu0 %895
        %v898 = vsel %vm375, %v892, %v896
        %v899 = vpack.c.bf16 %v898, %v898
        %v901 = vsel %vm395, %v875, 0
        %v904 = vsel %vm395, %v899, 0
        %906 = vmatprep.subr.bf16.mxu0 0
        %907 = vmatpush1.bf16.xpose.msra.mxu0 %v904
        %908 = vmatprep.subr.bf16.mxu0 0
        %909 = vmatpush1.bf16.xpose.msra.mxu0 0
        %910 = vmatprep.subr.bf16.mxu0 0
        %911 = vmatpush1.bf16.xpose.msra.mxu0 0
        %912 = vmatprep.subr.bf16.mxu0 0
        %913 = vmatpush1.bf16.xpose.msra.mxu0 0
        %914 = vmatprep.subr.bf16.mxu0 0
        %915 = vmatpush1.bf16.xpose.msra.mxu0 0
        %916 = vmatprep.subr.bf16.mxu0 0
        %917 = vmatpush1.bf16.xpose.msra.mxu0 0
        %918 = vmatprep.subr.bf16.mxu0 0
        %919 = vmatpush1.bf16.xpose.msra.mxu0 0
        %920 = vmatprep.subr.bf16.mxu0 0
        %921 = vmatpush1.bf16.xpose.msra.mxu0 0
        %922 = vmatprep.subr.bf16.mxu0 0
        %923 = vmatpush1.bf16.xpose.msra.mxu0 0
        %924 = vmatprep.subr.bf16.mxu0 0
        %925 = vmatpush1.bf16.xpose.msra.mxu0 0
        %926 = vmatprep.subr.bf16.mxu0 0
        %927 = vmatpush1.bf16.xpose.msra.mxu0 0
        %928 = vmatprep.subr.bf16.mxu0 0
        %929 = vmatpush1.bf16.xpose.msra.mxu0 0
        %930 = vmatprep.subr.bf16.mxu0 0
        %931 = vmatpush1.bf16.xpose.msra.mxu0 0
        %932 = vmatprep.subr.bf16.mxu0 0
        %933 = vmatpush1.bf16.xpose.msra.mxu0 0
        %934 = vmatprep.subr.bf16.mxu0 0
        %935 = vmatpush1.bf16.xpose.msra.mxu0 0
        %936 = vmatprep.subr.bf16.mxu0 0
        %937 = vmatpush1.bf16.xpose.msra.mxu0 0
        %938 = vmatprep.mubr.bf16.mxu0 0
        %939 = vmatmul.mubr.bf16.gmra.mrb[0].mxu0 %v901
        %v940 = vpop.f32.mrb[0].mxu0
        %v941 = vadd.f32 %v351, %v940
        %v942 = vpop.f32.mrb[0].mxu0
        %v943 = vpop.f32.mrb[0].mxu0
        %v944 = vpop.f32.mrb[0].mxu0
        %945 = vdwg.mxu0
        %v946 = vsel %vm442, %v941, -inf
        %947 = vmax.xlane.f32.xlu0 %v946
        %v948 = vpop.xlane.xlu0 %947
        %v949 = vsub.f32 %v941, %v948
        %v950 = vmul.f32 %v949, 1.442695
        %v951 = vpow.pop %v950
        %v952 = vsel %vm442, %v951, 0.0
        %953 = vadd.xlane.f32.xlu0 %v952
        %v954 = vpop.xlane.xlu0 %953
        %v955 = vpack.c.bf16 %v951, %v951
        %956 = vrot.lane.b32.xlu0 %v621, 32
        %v957 = vpop.permute.xlu0 %956
        %v959 = vsel %vm442, %v955, 0
        %v962 = vsel %vm456, %v957, 0
        %964 = vmatprep.subr.bf16.mxu0 0
        %965 = vmatpush1.bf16.msra.mxu0 %v962
        %966 = vmatprep.subr.bf16.mxu0 0
        %967 = vmatpush1.bf16.msra.mxu0 0
        %968 = vmatprep.subr.bf16.mxu0 0
        %969 = vmatpush1.bf16.msra.mxu0 0
        %970 = vmatprep.subr.bf16.mxu0 0
        %971 = vmatpush1.bf16.msra.mxu0 0
        %972 = vmatprep.subr.bf16.mxu0 0
        %973 = vmatpush1.bf16.msra.mxu0 0
        %974 = vmatprep.subr.bf16.mxu0 0
        %975 = vmatpush1.bf16.msra.mxu0 0
        %976 = vmatprep.subr.bf16.mxu0 0
        %977 = vmatpush1.bf16.msra.mxu0 0
        %978 = vmatprep.subr.bf16.mxu0 0
        %979 = vmatpush1.bf16.msra.mxu0 0
        %980 = vmatprep.subr.bf16.mxu0 0
        %981 = vmatpush1.bf16.msra.mxu0 0
        %982 = vmatprep.subr.bf16.mxu0 0
        %983 = vmatpush1.bf16.msra.mxu0 0
        %984 = vmatprep.subr.bf16.mxu0 0
        %985 = vmatpush1.bf16.msra.mxu0 0
        %986 = vmatprep.subr.bf16.mxu0 0
        %987 = vmatpush1.bf16.msra.mxu0 0
        %988 = vmatprep.subr.bf16.mxu0 0
        %989 = vmatpush1.bf16.msra.mxu0 0
        %990 = vmatprep.subr.bf16.mxu0 0
        %991 = vmatpush1.bf16.msra.mxu0 0
        %992 = vmatprep.subr.bf16.mxu0 0
        %993 = vmatpush1.bf16.msra.mxu0 0
        %994 = vmatprep.subr.bf16.mxu0 0
        %995 = vmatpush1.bf16.msra.mxu0 0
        %996 = vmatprep.mubr.bf16.mxu0 0
        %997 = vmatmul.mubr.bf16.gmra.mrb[0].mxu0 %v959
        %v998 = vpop.f32.mrb[0].mxu0
        %v999 = vadd.f32 0.0, %v998
        %v1000 = vpop.f32.mrb[0].mxu0
        %v1001 = vpop.f32.mrb[0].mxu0
        %v1002 = vpop.f32.mrb[0].mxu0
        %1003 = vdwg.mxu0
        %v1004 = vrcp.pop %v954
        %v1005 = vmul.f32 %v999, %v1004
        %1007 = vrot.lane.b32.xlu0 %v671, 32
        %v1008 = vpop.permute.xlu0 %1007
        %1011 = vrot.lane.b32.xlu0 %v838, 64
        %v1012 = vpop.permute.xlu0 %1011
        %1015 = vrot.lane.b32.xlu0 %v1005, 96
        %v1016 = vpop.permute.xlu0 %1015
        %v1018 = vsel %vm395, %v501, %v1008
        %vm1019 = vcmask 523264
        %v1020 = vsel %vm1019, %v1018, %v1012
        %vm1021 = vcmask 785408
        %v1022 = vsel %vm1021, %v1020, %v1016
        %v1023 = vpack.c.bf16 %v1022, %v1022
        %v1024 = vld [vmem:[#allocation8] sm:$0xf]
        %v1025 = vld [vmem:[#allocation8 + $0x4] sm:$0xf]
        %v1026 = vld [vmem:[#allocation8 + $0x8] sm:$0xf]
        %v1027 = vld [vmem:[#allocation8 + $0xc] sm:$0xf]
        %v1028 = vld [vmem:[#allocation8 + $0x10] sm:$0xf]
        %v1029 = vld [vmem:[#allocation8 + $0x14] sm:$0xf]
        %v1030 = vld [vmem:[#allocation8 + $0x18] sm:$0xf]
        %v1031 = vld [vmem:[#allocation8 + $0x1c] sm:$0xf]
        %v1032 = vld [vmem:[#allocation8 + $0x20] sm:$0xf]
        %v1033 = vld [vmem:[#allocation8 + $0x24] sm:$0xf]
        %v1034 = vld [vmem:[#allocation8 + $0x28] sm:$0xf]
        %v1035 = vld [vmem:[#allocation8 + $0x2c] sm:$0xf]
        %v1036 = vld [vmem:[#allocation8 + $0x30] sm:$0xf]
        %v1037 = vld [vmem:[#allocation8 + $0x34] sm:$0xf]
        %v1038 = vld [vmem:[#allocation8 + $0x38] sm:$0xf]
        %v1039 = vld [vmem:[#allocation8 + $0x3c] sm:$0xf]
        %v1040 = vld [vmem:[%s5] sm:$0x1]
        %v1042 = vlaneseq
        %v1043 = vshrl.u32 %v1042, 7
        %v1044 = vsub.s32 0, %v1043
        %v1045 = vrot.slane %v1040, %v1044
        %v1063 = vunpack.c.l.b16 %v1024
        %v1064 = vunpack.c.l.b16 %v1025
        %v1065 = vunpack.c.l.b16 %v1026
        %v1066 = vunpack.c.l.b16 %v1027
        %v1067 = vunpack.c.l.b16 %v1028
        %v1068 = vunpack.c.l.b16 %v1029
        %v1069 = vunpack.c.l.b16 %v1030
        %v1070 = vunpack.c.l.b16 %v1031
        %v1071 = vunpack.c.l.b16 %v1032
        %v1072 = vunpack.c.l.b16 %v1033
        %v1073 = vunpack.c.l.b16 %v1034
        %v1074 = vunpack.c.l.b16 %v1035
        %v1075 = vunpack.c.l.b16 %v1036
        %v1076 = vunpack.c.l.b16 %v1037
        %v1077 = vunpack.c.l.b16 %v1038
        %v1078 = vunpack.c.l.b16 %v1039
        %v1079 = vpack.c.b16 %v1064, %v1063
        %v1080 = vpack.c.b16 %v1066, %v1065
        %v1081 = vpack.c.b16 %v1068, %v1067
        %v1082 = vpack.c.b16 %v1070, %v1069
        %v1083 = vpack.c.b16 %v1072, %v1071
        %v1084 = vpack.c.b16 %v1074, %v1073
        %v1085 = vpack.c.b16 %v1076, %v1075
        %v1086 = vpack.c.b16 %v1078, %v1077
        %1095 = vmatprep.subr.bf16.mxu0 0
        %1096 = vmatpush1.bf16.msra.mxu0 %v1079
        %1097 = vmatprep.subr.bf16.mxu0 0
        %1098 = vmatpush1.bf16.msra.mxu0 %v1080
        %1099 = vmatprep.subr.bf16.mxu0 0
        %1100 = vmatpush1.bf16.msra.mxu0 %v1081
        %1101 = vmatprep.subr.bf16.mxu0 0
        %1102 = vmatpush1.bf16.msra.mxu0 %v1082
        %1103 = vmatprep.subr.bf16.mxu0 0
        %1104 = vmatpush1.bf16.msra.mxu0 %v1083
        %1105 = vmatprep.subr.bf16.mxu0 0
        %1106 = vmatpush1.bf16.msra.mxu0 %v1084
        %1107 = vmatprep.subr.bf16.mxu0 0
        %1108 = vmatpush1.bf16.msra.mxu0 %v1085
        %1109 = vmatprep.subr.bf16.mxu0 0
        %1110 = vmatpush1.bf16.msra.mxu0 %v1086
        %1111 = vmatprep.subr.bf16.mxu0 0
        %1112 = vmatpush1.bf16.msra.mxu0 0
        %1113 = vmatprep.subr.bf16.mxu0 0
        %1114 = vmatpush1.bf16.msra.mxu0 0
        %1115 = vmatprep.subr.bf16.mxu0 0
        %1116 = vmatpush1.bf16.msra.mxu0 0
        %1117 = vmatprep.subr.bf16.mxu0 0
        %1118 = vmatpush1.bf16.msra.mxu0 0
        %1119 = vmatprep.subr.bf16.mxu0 0
        %1120 = vmatpush1.bf16.msra.mxu0 0
        %1121 = vmatprep.subr.bf16.mxu0 0
        %1122 = vmatpush1.bf16.msra.mxu0 0
        %1123 = vmatprep.subr.bf16.mxu0 0
        %1124 = vmatpush1.bf16.msra.mxu0 0
        %1125 = vmatprep.subr.bf16.mxu0 0
        %1126 = vmatpush1.bf16.msra.mxu0 0
        %1127 = vmatprep.mubr.bf16.mxu0 0
        %1128 = vmatmul.mubr.bf16.gmra.mrb[0].mxu0 %v1023
        %v1129 = vpop.f32.mrb[0].mxu0
        %v1130 = vadd.f32 %v1045, %v1129
        %v1131 = vpop.f32.mrb[0].mxu0
        %v1132 = vpop.f32.mrb[0].mxu0
        %v1133 = vpop.f32.mrb[0].mxu0
        %1134 = vdwg.mxu0
        %1135 = vst [vmem:[%s332] sm:$0xff] %v1130
        %s1136 = sand.u32 %s183, 1
        %s1137 = scalar_lea.sflag [#allocation4], %s1136
        %s1138 = sand.u32 %s183, 1
        %s1139 = smul.addr %s1138, 8
        %s1140 = scalar_lea.vmem [#allocation10], %s1139
        // Predicated region
        $region61: #{tpu_custom_call.1} parent=43 // pred_check
          %p1141 = pneg %p193
        $region62: #{tpu_custom_call.1} parent=43 // pred_check_branch
          %1143 = sbr.rel (%p1141) target = $region64
        $region63: #{tpu_custom_call.1} parent=43 // pred_region
          %s1145 = ssub.s32 128, 128
          %1146 = vsyncadd %s1137, %s1145
          %s1147 = sadd.s32 %s30, %s29
          %s1148 = smul.addr %s1147, 128
          %s1149 = scalar_lea.hbm %s6, %s1148
          %s1151 = sshll.u32 %s1140, 4
          %s1152 = int_to_ptr.vmem [resolvable:$true] %s1151
          %1154 = dma.vmem_to_hbm [thread:$0]  %s1152, 128, %s1149, %s1137
        $region64: #{tpu_custom_call.1} parent=43 // pred_fallthru
          _
      $region44: #{tpu_custom_call.1} parent=5 // pred_fallthru
        _
      %p1155 = scmp.le.s32.totalorder 2, %s20
      // Predicated region
      $region65: #{tpu_custom_call.1} parent=5 // pred_check
        %p1156 = pneg %p1155
      $region66: #{tpu_custom_call.1} parent=5 // pred_check_branch
        %1158 = sbr.rel (%p1156) target = $region68
      $region67: #{tpu_custom_call.1} parent=5 // pred_region
        %s1159 = ssub.s32 %s20, 2
        // Predicated region
        $region69: #{tpu_custom_call.1} parent=67 // pred_check
          %p1160 = pneg %p199
        $region70: #{tpu_custom_call.1} parent=67 // pred_check_branch
          %1162 = sbr.rel (%p1160) target = $region72
        $region71: #{tpu_custom_call.1} parent=67 // pred_region
          %s1163 = sand.u32 %s184, 1
          %s1164 = scalar_lea.sflag [#allocation4], %s1163
          %s1165 = sand.u32 %s184, 1
          %s1166 = smul.addr %s1165, 8
          %s1167 = scalar_lea.vmem [#allocation10], %s1166
          %1168 = dma.done %s1164, 128
        $region72: #{tpu_custom_call.1} parent=67 // pred_fallthru
          _
      $region68: #{tpu_custom_call.1} parent=5 // pred_fallthru
        _
    $region6: #{tpu_custom_call.1} parent=1 // loop_footer
      %s24 = sadd.s32 1, %s20
    $region7: #{tpu_custom_call.1} parent=1 // loop_footer_branch
      %19 = sbr.rel target = $region3
    $region8: #{tpu_custom_call.1} parent=1 // loop_exit
      _
    %1169 = vsyncpa [#allocation3], 1
    %s1170 = scalar_lea.sflag [#allocation3], 1
    %1171 = vsyncpa %s1170, 1
    %1172 = vsyncpa [#allocation6], 1
    %1173 = vsyncpa [#allocation9], 1
    %1174 = vsyncpa [#allocation4], 1
    %s1175 = scalar_lea.sflag [#allocation4], 1
    %1176 = vsyncpa %s1175, 1

</llo_original>
